<compile_context>
chip_gen: v5e
topology: v5e:2x2
jax: 0.10.0
libtpu: 0.0.40
codegen_flags: <defaults>
</compile_context>

<pallas_src>
import jax
import jax.numpy as jnp
import numpy as np
from jax.experimental import pallas as pl
from jax.experimental.pallas import tpu as pltpu


# ----------------------------------------------------------------------------
# Positional encoding table (plain JAX glue) -- standard sinusoidal.
# ----------------------------------------------------------------------------
def get_positional_encoding(max_len, d_model, T=1000):
    position = jnp.arange(max_len, dtype=jnp.float32)[:, None]              # (L, 1)
    div_term = jnp.exp(
        jnp.arange(0, d_model, 2, dtype=jnp.float32) * (-jnp.log(jnp.float32(T)) / d_model)
    )                                                                        # (d/2,)
    pe = jnp.zeros((max_len, d_model), dtype=jnp.float32)
    pe = pe.at[:, 0::2].set(jnp.sin(position * div_term))
    pe = pe.at[:, 1::2].set(jnp.cos(position * div_term))
    return pe


# ----------------------------------------------------------------------------
# Pallas kernel (single grid step).
#   pos_ref  : (Bp*T,)    i32  SMEM (scalar-prefetched) positions + shift, batch-major
#   x_ref    : (Bp*T, C)  bf16 input, batch-major rows (b*T + t), batch padded to Bp
#   pe_ref   : (Lp, C)    f32  full positional-encoding table
#   wih_ref  : (C, 3H)    bf16 W_ih^T, gate order [r, z, n]
#   whh_ref  : (H, 3H)    bf16 W_hh^T
#   bgi_ref  : (1, 3H)    f32  b_ih + [b_hh_r, b_hh_z, 0]
#   bhhn_ref : (1, H)     f32  b_hh_n
#   out_ref  : (Bp, H)    f32  hidden state at the last timestep
#   xf_ref   : (Bp*T, C)  f32  scratch: x upcast slab (batch-major)
#   xe_ref   : (Bp*T, C)  f32  scratch: x + pe, TIME-major rows (t*Bp + b)
#   gi_ref   : (Bp*T, 3H) f32  scratch: hoisted input projection (time-major)
# ----------------------------------------------------------------------------
def gru_kernel(pos_ref, x_ref, pe_ref, wih_ref, whh_ref, bgi_ref, bhhn_ref,
               out_ref, xf_ref, xe_ref, gi_ref):
    Bp, H = out_ref.shape
    rows, C = x_ref.shape
    T = rows // Bp

    # Upcast the bf16 input slab once (so the gather loop only touches f32 rows).
    xf_ref[...] = x_ref[...].astype(jnp.float32)

    # --- In-kernel PE gather (scalar-prefetched positions), fused with the
    #     batch-major -> time-major row permutation: xe[t*Bp + b] = x[b*T + t] + pe[pos].
    @pl.loop(0, Bp)
    def _batch(b):
        @pl.loop(0, T)
        def _time(t):
            src = b * T + t
            dst = t * Bp + b
            p = pos_ref[src]
            xe_ref[pl.ds(dst, 1), :] = (
                xf_ref[pl.ds(src, 1), :] + pe_ref[pl.ds(p, 1), :]
            )

    # --- Hoisted input projection: one bf16 MXU matmul over all timesteps -----
    gi_ref[...] = (
        jnp.dot(xe_ref[...].astype(jnp.bfloat16), wih_ref[...],
                preferred_element_type=jnp.float32)
        + bgi_ref[...]
    )

    # --- Recurrence over the VMEM-resident G_i slab. Loop-invariant operands
    #     are loaded once (unroll=True would otherwise stamp T copies of the vld).
    whh = whh_ref[...]          # (H, 3H) bf16
    bhh_n = bhhn_ref[...]       # (1, H)  f32

    def step(t, h):
        off = pl.multiple_of(t * Bp, 8)          # Bp is a multiple of 8 by construction
        gi = gi_ref[pl.ds(off, Bp), :]           # (Bp, 3H), contiguous time-major rows
        gh = jnp.dot(h.astype(jnp.bfloat16), whh,
                     preferred_element_type=jnp.float32)                     # (Bp, 3H)
        r = jax.nn.sigmoid(gi[:, 0:H] + gh[:, 0:H])
        z = jax.nn.sigmoid(gi[:, H:2 * H] + gh[:, H:2 * H])
        n = jnp.tanh(gi[:, 2 * H:3 * H] + r * (gh[:, 2 * H:3 * H] + bhh_n))
        return (1.0 - z) * n + z * h

    h0 = jnp.zeros((Bp, H), jnp.float32)
    h_last = jax.lax.fori_loop(0, T, step, h0, unroll=True)
    out_ref[...] = h_last.astype(out_ref.dtype)


# ----------------------------------------------------------------------------
# Wrapper: only padding / flattening / weight re-layout in JAX; PE gather, PE add,
# projections, gates and the recurrence all run in the kernel.
# ----------------------------------------------------------------------------
def gru_forward(inp, positions, params, pe_table, max_temporal_shift):
    # inp: (B, T, C) f32 ; positions: (B, T) int32
    B, T, C = inp.shape
    wih, whh, bih, bhh = params["wih"], params["whh"], params["bih"], params["bhh"]
    H = whh.shape[1]

    # pad batch to a sublane multiple (8); batch-major flatten is a free reshape
    Bp = int(-(-B // 8) * 8)
    x_p = jnp.pad(inp, ((0, Bp - B), (0, 0), (0, 0))).astype(jnp.bfloat16)   # bf16 stream
    x_bm = x_p.reshape(Bp * T, C)

    pos_p = jnp.pad(positions, ((0, Bp - B), (0, 0)))                        # pad rows -> pos 0
    pos_flat = (pos_p + max_temporal_shift).astype(jnp.int32).reshape(Bp * T)

    # PE table: pad rows to a multiple of 8, ship whole table (small) to VMEM once
    L = pe_table.shape[0]
    Lp = int(-(-L // 8) * 8)
    pe_p = jnp.pad(pe_table.astype(jnp.float32), ((0, Lp - L), (0, 0)))

    # weights transposed + bf16 for the MXU; gate order [r, z, n] along 3H
    wih_t = jnp.asarray(wih.T, jnp.bfloat16)                  # (C, 3H)
    whh_t = jnp.asarray(whh.T, jnp.bfloat16)                  # (H, 3H)
    # fold b_ih (and b_hh for r/z gates) into the hoisted projection bias
    bgi = (jnp.asarray(bih, jnp.float32)
           + jnp.concatenate([jnp.asarray(bhh[:2 * H], jnp.float32),
                              jnp.zeros((H,), jnp.float32)]))[None, :]       # (1, 3H)
    bhh_n = jnp.asarray(bhh[2 * H:], jnp.float32)[None, :]                   # (1, H)

    out = pl.pallas_call(
        gru_kernel,
        out_shape=jax.ShapeDtypeStruct((Bp, H), jnp.float32),
        grid_spec=pltpu.PrefetchScalarGridSpec(
            num_scalar_prefetch=1,                       # positions -> SMEM
            grid=(1,),
            in_specs=[
                pl.BlockSpec((Bp * T, C), lambda i, pos: (0, 0)),   # x (bf16, batch-major)
                pl.BlockSpec((Lp, C), lambda i, pos: (0, 0)),       # PE table (f32)
                pl.BlockSpec((C, 3 * H), lambda i, pos: (0, 0)),    # W_ih^T (bf16)
                pl.BlockSpec((H, 3 * H), lambda i, pos: (0, 0)),    # W_hh^T (bf16)
                pl.BlockSpec((1, 3 * H), lambda i, pos: (0, 0)),    # folded input bias
                pl.BlockSpec((1, H), lambda i, pos: (0, 0)),        # b_hh (n gate)
            ],
            out_specs=pl.BlockSpec((Bp, H), lambda i, pos: (0, 0)),
            scratch_shapes=[
                pltpu.VMEM((Bp * T, C), jnp.float32),        # x upcast slab
                pltpu.VMEM((Bp * T, C), jnp.float32),        # x + pe (time-major)
                pltpu.VMEM((Bp * T, 3 * H), jnp.float32),    # hoisted G_i slab
            ],
        ),
        compiler_params=pltpu.CompilerParams(dimension_semantics=("arbitrary",)),
    )(pos_flat, x_bm, pe_p, wih_t, whh_t, bgi, bhh_n)
    return out[:B]


# ----------------------------------------------------------------------------
# Pure-JAX reference (lax.scan, f32) for correctness checking.
# ----------------------------------------------------------------------------
def gru_reference(inp, positions, params, pe_table, max_temporal_shift):
    wih, whh, bih, bhh = params["wih"], params["whh"], params["bih"], params["bhh"]
    H = whh.shape[1]
    x = inp + pe_table[positions + max_temporal_shift]        # (B, T, C)
    x_tm = jnp.transpose(x, (1, 0, 2))                        # (T, B, C)
    h0 = jnp.zeros((inp.shape[0], H), jnp.float32)

    def step(h, x_t):
        gi = jnp.dot(x_t, wih.T, preferred_element_type=jnp.float32) + bih
        gh = jnp.dot(h, whh.T, preferred_element_type=jnp.float32) + bhh
        r = jax.nn.sigmoid(gi[:, 0:H] + gh[:, 0:H])
        z = jax.nn.sigmoid(gi[:, H:2 * H] + gh[:, H:2 * H])
        n = jnp.tanh(gi[:, 2 * H:3 * H] + r * gh[:, 2 * H:3 * H])
        h_new = (1.0 - z) * n + z * h
        return h_new, None

    h_last, _ = jax.lax.scan(step, h0, x_tm)
    return h_last


if __name__ == "__main__":
    # Small shapes consistent with the module (in_channels == hidden_dim == 128 default).
    B, T = 2, 8
    C = 128            # in_channels
    H = 128            # hidden_dim
    MAX_POSITION = 365
    MAX_TEMPORAL_SHIFT = 100

    key = jax.random.PRNGKey(0)
    k_x, k_pos, k1, k2, k3, k4 = jax.random.split(key, 6)

    inp = jax.random.normal(k_x, (B, T, C), dtype=jnp.float32)
    positions = jax.random.randint(k_pos, (B, T), 0, MAX_POSITION, dtype=jnp.int32)

    # Parameter init mimicking PyTorch nn.GRU: U(-1/sqrt(H), 1/sqrt(H))
    bound = 1.0 / np.sqrt(H)
    params = {
        "wih": jax.random.uniform(k1, (3 * H, C), jnp.float32, -bound, bound),
        "whh": jax.random.uniform(k2, (3 * H, H), jnp.float32, -bound, bound),
        "bih": jax.random.uniform(k3, (3 * H,), jnp.float32, -bound, bound),
        "bhh": jax.random.uniform(k4, (3 * H,), jnp.float32, -bound, bound),
    }

    pe_table = get_positional_encoding(MAX_POSITION + 2 * MAX_TEMPORAL_SHIFT, C, T=1000)

    out = gru_forward(inp, positions, params, pe_table, MAX_TEMPORAL_SHIFT)
    out = jax.block_until_ready(out)

    ref = jax.block_until_ready(
        gru_reference(inp, positions, params, pe_table, MAX_TEMPORAL_SHIFT)
    )
    # bf16 activations + bf16 MXU inputs with f32 accumulation vs full-f32 reference
    # accumulate ~1e-2-level error over T steps -> 3e-2 tolerance.
    np.testing.assert_allclose(np.asarray(out), np.asarray(ref), rtol=3e-2, atol=3e-2)

    assert out.shape == (B, H)
    print("KERNEL_OK")
</pallas_src>

<mosaic_0001>
module attributes {stable_mosaic.version = 11 : i64} {
  func.func @gru_kernel(%arg0: i32, %arg1: memref<64xi32, #tpu.memory_space<smem>>, %arg2: memref<64x128xbf16, #tpu.memory_space<vmem>>, %arg3: memref<568x128xf32, #tpu.memory_space<vmem>>, %arg4: memref<128x384xbf16, #tpu.memory_space<vmem>>, %arg5: memref<128x384xbf16, #tpu.memory_space<vmem>>, %arg6: memref<1x384xf32, #tpu.memory_space<vmem>>, %arg7: memref<1x128xf32, #tpu.memory_space<vmem>>, %arg8: memref<8x128xf32, #tpu.memory_space<vmem>>, %arg9: memref<64x128xf32, #tpu.memory_space<vmem>>, %arg10: memref<64x128xf32, #tpu.memory_space<vmem>>, %arg11: memref<64x384xf32, #tpu.memory_space<vmem>>) attributes {dimension_semantics = [#tpu.dimension_semantics<arbitrary>], iteration_bounds = array<i64: 1>, scalar_prefetch = 1 : i64, scratch_operands = 3 : i64, tpu.core_type = #tpu.core_type<tc>, window_params = [{pipeline_mode = #tpu.pipeline_mode<synchronous>, transform_indices = @transform_0, window_bounds = array<i64: 64, 128>}, {pipeline_mode = #tpu.pipeline_mode<synchronous>, transform_indices = @transform_1, window_bounds = array<i64: 568, 128>}, {pipeline_mode = #tpu.pipeline_mode<synchronous>, transform_indices = @transform_2, window_bounds = array<i64: 128, 384>}, {pipeline_mode = #tpu.pipeline_mode<synchronous>, transform_indices = @transform_3, window_bounds = array<i64: 128, 384>}, {pipeline_mode = #tpu.pipeline_mode<synchronous>, transform_indices = @transform_4, window_bounds = array<i64: 1, 384>}, {pipeline_mode = #tpu.pipeline_mode<synchronous>, transform_indices = @transform_5, window_bounds = array<i64: 1, 128>}, {pipeline_mode = #tpu.pipeline_mode<synchronous>, transform_indices = @transform_6, window_bounds = array<i64: 8, 128>}]} {
    %c0 = arith.constant 0 : index
    %c0_0 = arith.constant 0 : index
    %0 = vector.load %arg2[%c0, %c0_0] : memref<64x128xbf16, #tpu.memory_space<vmem>>, vector<64x128xbf16>
    %1 = arith.extf %0 : vector<64x128xbf16> to vector<64x128xf32>
    %c0_1 = arith.constant 0 : index
    %c0_2 = arith.constant 0 : index
    %2 = vector.load %arg9[%c0_1, %c0_2] : memref<64x128xf32, #tpu.memory_space<vmem>>, vector<64x128xf32>
    tpu.vector_store %arg9[%c0_1, %c0_2], %1 {strides = array<i32>} : memref<64x128xf32, #tpu.memory_space<vmem>>, vector<64x128xf32>,
    %c0_i32 = arith.constant 0 : i32
    %c8_i32 = arith.constant 8 : i32
    %3 = arith.addi %c0_i32, %c8_i32 : i32
    %c1_i32 = arith.constant 1 : i32
    scf.for %arg12 = %c0_i32 to %3 step %c1_i32  : i32 {
      %c1_i32_70 = arith.constant 1 : i32
      %288 = arith.muli %arg12, %c1_i32_70 : i32
      %c0_i32_71 = arith.constant 0 : i32
      %289 = arith.addi %c0_i32_71, %288 : i32
      %c0_i32_72 = arith.constant 0 : i32
      %c8_i32_73 = arith.constant 8 : i32
      %290 = arith.addi %c0_i32_72, %c8_i32_73 : i32
      %c1_i32_74 = arith.constant 1 : i32
      scf.for %arg13 = %c0_i32_72 to %290 step %c1_i32_74  : i32 {
        %c1_i32_76 = arith.constant 1 : i32
        %291 = arith.muli %arg13, %c1_i32_76 : i32
        %c0_i32_77 = arith.constant 0 : i32
        %292 = arith.addi %c0_i32_77, %291 : i32
        %c8_i32_78 = arith.constant 8 : i32
        %293 = arith.muli %289, %c8_i32_78 : i32
        %294 = arith.addi %293, %292 : i32
        %c8_i32_79 = arith.constant 8 : i32
        %295 = arith.muli %292, %c8_i32_79 : i32
        %296 = arith.addi %295, %289 : i32
        %297 = arith.index_cast %294 : i32 to index
        %298 = memref.load %arg1[%297] : memref<64xi32, #tpu.memory_space<smem>>
        %299 = arith.index_cast %294 : i32 to index
        %c0_80 = arith.constant 0 : index
        %300 = vector.load %arg9[%299, %c0_80] : memref<64x128xf32, #tpu.memory_space<vmem>>, vector<1x128xf32>
        %301 = arith.index_cast %298 : i32 to index
        %c0_81 = arith.constant 0 : index
        %302 = vector.load %arg3[%301, %c0_81] : memref<568x128xf32, #tpu.memory_space<vmem>>, vector<1x128xf32>
        %303 = arith.addf %300, %302 : vector<1x128xf32>
        %304 = arith.index_cast %296 : i32 to index
        %c0_82 = arith.constant 0 : index
        %305 = vector.load %arg10[%304, %c0_82] : memref<64x128xf32, #tpu.memory_space<vmem>>, vector<1x128xf32>
        tpu.vector_store %arg10[%304, %c0_82], %303 {strides = array<i32>} : memref<64x128xf32, #tpu.memory_space<vmem>>, vector<1x128xf32>,
      }
      %c8_i32_75 = arith.constant 8 : i32
    }
    %c8_i32_3 = arith.constant 8 : i32
    %c0_4 = arith.constant 0 : index
    %c0_5 = arith.constant 0 : index
    %4 = vector.load %arg10[%c0_4, %c0_5] : memref<64x128xf32, #tpu.memory_space<vmem>>, vector<64x128xf32>
    %5 = arith.truncf %4 : vector<64x128xf32> to vector<64x128xbf16>
    %c0_6 = arith.constant 0 : index
    %c0_7 = arith.constant 0 : index
    %6 = vector.load %arg4[%c0_6, %c0_7] : memref<128x384xbf16, #tpu.memory_space<vmem>>, vector<128x384xbf16>
    %cst = arith.constant dense<0.000000e+00> : vector<64x384xf32>
    %7 = tpu.matmul %5, %6, %cst {dimension_numbers = #tpu.dot_dimension_numbers<[1], [0], [0], [1], [0, 0, 1, 1], [], []>} : vector<64x128xbf16>, vector<128x384xbf16>, vector<64x384xf32> -> vector<64x384xf32>
    %c0_8 = arith.constant 0 : index
    %c0_9 = arith.constant 0 : index
    %8 = vector.load %arg6[%c0_8, %c0_9] : memref<1x384xf32, #tpu.memory_space<vmem>>, vector<1x384xf32>
    %9 = vector.broadcast %8 : vector<1x384xf32> to vector<64x384xf32>
    %10 = arith.addf %7, %9 : vector<64x384xf32>
    %c0_10 = arith.constant 0 : index
    %c0_11 = arith.constant 0 : index
    %11 = vector.load %arg11[%c0_10, %c0_11] : memref<64x384xf32, #tpu.memory_space<vmem>>, vector<64x384xf32>
    tpu.vector_store %arg11[%c0_10, %c0_11], %10 {strides = array<i32>} : memref<64x384xf32, #tpu.memory_space<vmem>>, vector<64x384xf32>,
    %c0_12 = arith.constant 0 : index
    %c0_13 = arith.constant 0 : index
    %12 = vector.load %arg5[%c0_12, %c0_13] : memref<128x384xbf16, #tpu.memory_space<vmem>>, vector<128x384xbf16>
    %c0_14 = arith.constant 0 : index
    %c0_15 = arith.constant 0 : index
    %13 = vector.load %arg7[%c0_14, %c0_15] : memref<1x128xf32, #tpu.memory_space<vmem>>, vector<1x128xf32>
    %cst_16 = arith.constant 0.000000e+00 : f32
    %14 = vector.broadcast %cst_16 : f32 to vector<8x128xf32>
    %c0_i32_17 = arith.constant 0 : i32
    %c8_i32_18 = arith.constant 8 : i32
    %15 = arith.muli %c0_i32_17, %c8_i32_18 : i32
    %16 = tpu.assume_multiple %15, 8 : i32
    %17 = arith.index_cast %16 : i32 to index
    %c0_19 = arith.constant 0 : index
    %18 = vector.load %arg11[%17, %c0_19] : memref<64x384xf32, #tpu.memory_space<vmem>>, vector<8x384xf32>
    %19 = arith.truncf %14 : vector<8x128xf32> to vector<8x128xbf16>
    %cst_20 = arith.constant dense<0.000000e+00> : vector<8x384xf32>
    %20 = tpu.matmul %19, %12, %cst_20 {dimension_numbers = #tpu.dot_dimension_numbers<[1], [0], [0], [1], [0, 0, 1, 1], [], []>} : vector<8x128xbf16>, vector<128x384xbf16>, vector<8x384xf32> -> vector<8x384xf32>
    %21 = vector.extract_strided_slice %18 {offsets = [0, 0], sizes = [8, 128], strides = [1, 1]} : vector<8x384xf32> to vector<8x128xf32>
    %22 = vector.extract_strided_slice %20 {offsets = [0, 0], sizes = [8, 128], strides = [1, 1]} : vector<8x384xf32> to vector<8x128xf32>
    %23 = arith.addf %21, %22 : vector<8x128xf32>
    %24 = arith.negf %23 : vector<8x128xf32>
    %25 = math.exp %24 : vector<8x128xf32>
    %cst_21 = arith.constant 1.000000e+00 : f32
    %26 = vector.broadcast %cst_21 : f32 to vector<8x128xf32>
    %27 = arith.addf %26, %25 : vector<8x128xf32>
    %28 = arith.divf %26, %27 : vector<8x128xf32>
    %29 = vector.extract_strided_slice %18 {offsets = [0, 128], sizes = [8, 128], strides = [1, 1]} : vector<8x384xf32> to vector<8x128xf32>
    %30 = vector.extract_strided_slice %20 {offsets = [0, 128], sizes = [8, 128], strides = [1, 1]} : vector<8x384xf32> to vector<8x128xf32>
    %31 = arith.addf %29, %30 : vector<8x128xf32>
    %32 = arith.negf %31 : vector<8x128xf32>
    %33 = math.exp %32 : vector<8x128xf32>
    %cst_22 = arith.constant 1.000000e+00 : f32
    %34 = vector.broadcast %cst_22 : f32 to vector<8x128xf32>
    %35 = arith.addf %34, %33 : vector<8x128xf32>
    %36 = arith.divf %34, %35 : vector<8x128xf32>
    %37 = vector.extract_strided_slice %18 {offsets = [0, 256], sizes = [8, 128], strides = [1, 1]} : vector<8x384xf32> to vector<8x128xf32>
    %38 = vector.extract_strided_slice %20 {offsets = [0, 256], sizes = [8, 128], strides = [1, 1]} : vector<8x384xf32> to vector<8x128xf32>
    %39 = vector.broadcast %13 : vector<1x128xf32> to vector<8x128xf32>
    %40 = arith.addf %38, %39 : vector<8x128xf32>
    %41 = arith.mulf %28, %40 : vector<8x128xf32>
    %42 = arith.addf %37, %41 : vector<8x128xf32>
    %43 = math.tanh %42 : vector<8x128xf32>
    %cst_23 = arith.constant 1.000000e+00 : f32
    %44 = vector.broadcast %cst_23 : f32 to vector<8x128xf32>
    %45 = arith.subf %44, %36 : vector<8x128xf32>
    %46 = arith.mulf %45, %43 : vector<8x128xf32>
    %47 = arith.mulf %36, %14 : vector<8x128xf32>
    %48 = arith.addf %46, %47 : vector<8x128xf32>
    %c1_i32_24 = arith.constant 1 : i32
    %c8_i32_25 = arith.constant 8 : i32
    %49 = arith.muli %c1_i32_24, %c8_i32_25 : i32
    %50 = tpu.assume_multiple %49, 8 : i32
    %51 = arith.index_cast %50 : i32 to index
    %c0_26 = arith.constant 0 : index
    %52 = vector.load %arg11[%51, %c0_26] : memref<64x384xf32, #tpu.memory_space<vmem>>, vector<8x384xf32>
    %53 = arith.truncf %48 : vector<8x128xf32> to vector<8x128xbf16>
    %cst_27 = arith.constant dense<0.000000e+00> : vector<8x384xf32>
    %54 = tpu.matmul %53, %12, %cst_27 {dimension_numbers = #tpu.dot_dimension_numbers<[1], [0], [0], [1], [0, 0, 1, 1], [], []>} : vector<8x128xbf16>, vector<128x384xbf16>, vector<8x384xf32> -> vector<8x384xf32>
    %55 = vector.extract_strided_slice %52 {offsets = [0, 0], sizes = [8, 128], strides = [1, 1]} : vector<8x384xf32> to vector<8x128xf32>
    %56 = vector.extract_strided_slice %54 {offsets = [0, 0], sizes = [8, 128], strides = [1, 1]} : vector<8x384xf32> to vector<8x128xf32>
    %57 = arith.addf %55, %56 : vector<8x128xf32>
    %58 = arith.negf %57 : vector<8x128xf32>
    %59 = math.exp %58 : vector<8x128xf32>
    %cst_28 = arith.constant 1.000000e+00 : f32
    %60 = vector.broadcast %cst_28 : f32 to vector<8x128xf32>
    %61 = arith.addf %60, %59 : vector<8x128xf32>
    %62 = arith.divf %60, %61 : vector<8x128xf32>
    %63 = vector.extract_strided_slice %52 {offsets = [0, 128], sizes = [8, 128], strides = [1, 1]} : vector<8x384xf32> to vector<8x128xf32>
    %64 = vector.extract_strided_slice %54 {offsets = [0, 128], sizes = [8, 128], strides = [1, 1]} : vector<8x384xf32> to vector<8x128xf32>
    %65 = arith.addf %63, %64 : vector<8x128xf32>
    %66 = arith.negf %65 : vector<8x128xf32>
    %67 = math.exp %66 : vector<8x128xf32>
    %cst_29 = arith.constant 1.000000e+00 : f32
    %68 = vector.broadcast %cst_29 : f32 to vector<8x128xf32>
    %69 = arith.addf %68, %67 : vector<8x128xf32>
    %70 = arith.divf %68, %69 : vector<8x128xf32>
    %71 = vector.extract_strided_slice %52 {offsets = [0, 256], sizes = [8, 128], strides = [1, 1]} : vector<8x384xf32> to vector<8x128xf32>
    %72 = vector.extract_strided_slice %54 {offsets = [0, 256], sizes = [8, 128], strides = [1, 1]} : vector<8x384xf32> to vector<8x128xf32>
    %73 = vector.broadcast %13 : vector<1x128xf32> to vector<8x128xf32>
    %74 = arith.addf %72, %73 : vector<8x128xf32>
    %75 = arith.mulf %62, %74 : vector<8x128xf32>
    %76 = arith.addf %71, %75 : vector<8x128xf32>
    %77 = math.tanh %76 : vector<8x128xf32>
    %cst_30 = arith.constant 1.000000e+00 : f32
    %78 = vector.broadcast %cst_30 : f32 to vector<8x128xf32>
    %79 = arith.subf %78, %70 : vector<8x128xf32>
    %80 = arith.mulf %79, %77 : vector<8x128xf32>
    %81 = arith.mulf %70, %48 : vector<8x128xf32>
    %82 = arith.addf %80, %81 : vector<8x128xf32>
    %c2_i32 = arith.constant 2 : i32
    %c8_i32_31 = arith.constant 8 : i32
    %83 = arith.muli %c2_i32, %c8_i32_31 : i32
    %84 = tpu.assume_multiple %83, 8 : i32
    %85 = arith.index_cast %84 : i32 to index
    %c0_32 = arith.constant 0 : index
    %86 = vector.load %arg11[%85, %c0_32] : memref<64x384xf32, #tpu.memory_space<vmem>>, vector<8x384xf32>
    %87 = arith.truncf %82 : vector<8x128xf32> to vector<8x128xbf16>
    %cst_33 = arith.constant dense<0.000000e+00> : vector<8x384xf32>
    %88 = tpu.matmul %87, %12, %cst_33 {dimension_numbers = #tpu.dot_dimension_numbers<[1], [0], [0], [1], [0, 0, 1, 1], [], []>} : vector<8x128xbf16>, vector<128x384xbf16>, vector<8x384xf32> -> vector<8x384xf32>
    %89 = vector.extract_strided_slice %86 {offsets = [0, 0], sizes = [8, 128], strides = [1, 1]} : vector<8x384xf32> to vector<8x128xf32>
    %90 = vector.extract_strided_slice %88 {offsets = [0, 0], sizes = [8, 128], strides = [1, 1]} : vector<8x384xf32> to vector<8x128xf32>
    %91 = arith.addf %89, %90 : vector<8x128xf32>
    %92 = arith.negf %91 : vector<8x128xf32>
    %93 = math.exp %92 : vector<8x128xf32>
    %cst_34 = arith.constant 1.000000e+00 : f32
    %94 = vector.broadcast %cst_34 : f32 to vector<8x128xf32>
    %95 = arith.addf %94, %93 : vector<8x128xf32>
    %96 = arith.divf %94, %95 : vector<8x128xf32>
    %97 = vector.extract_strided_slice %86 {offsets = [0, 128], sizes = [8, 128], strides = [1, 1]} : vector<8x384xf32> to vector<8x128xf32>
    %98 = vector.extract_strided_slice %88 {offsets = [0, 128], sizes = [8, 128], strides = [1, 1]} : vector<8x384xf32> to vector<8x128xf32>
    %99 = arith.addf %97, %98 : vector<8x128xf32>
    %100 = arith.negf %99 : vector<8x128xf32>
    %101 = math.exp %100 : vector<8x128xf32>
    %cst_35 = arith.constant 1.000000e+00 : f32
    %102 = vector.broadcast %cst_35 : f32 to vector<8x128xf32>
    %103 = arith.addf %102, %101 : vector<8x128xf32>
    %104 = arith.divf %102, %103 : vector<8x128xf32>
    %105 = vector.extract_strided_slice %86 {offsets = [0, 256], sizes = [8, 128], strides = [1, 1]} : vector<8x384xf32> to vector<8x128xf32>
    %106 = vector.extract_strided_slice %88 {offsets = [0, 256], sizes = [8, 128], strides = [1, 1]} : vector<8x384xf32> to vector<8x128xf32>
    %107 = vector.broadcast %13 : vector<1x128xf32> to vector<8x128xf32>
    %108 = arith.addf %106, %107 : vector<8x128xf32>
    %109 = arith.mulf %96, %108 : vector<8x128xf32>
    %110 = arith.addf %105, %109 : vector<8x128xf32>
    %111 = math.tanh %110 : vector<8x128xf32>
    %cst_36 = arith.constant 1.000000e+00 : f32
    %112 = vector.broadcast %cst_36 : f32 to vector<8x128xf32>
    %113 = arith.subf %112, %104 : vector<8x128xf32>
    %114 = arith.mulf %113, %111 : vector<8x128xf32>
    %115 = arith.mulf %104, %82 : vector<8x128xf32>
    %116 = arith.addf %114, %115 : vector<8x128xf32>
    %c3_i32 = arith.constant 3 : i32
    %c8_i32_37 = arith.constant 8 : i32
    %117 = arith.muli %c3_i32, %c8_i32_37 : i32
    %118 = tpu.assume_multiple %117, 8 : i32
    %119 = arith.index_cast %118 : i32 to index
    %c0_38 = arith.constant 0 : index
    %120 = vector.load %arg11[%119, %c0_38] : memref<64x384xf32, #tpu.memory_space<vmem>>, vector<8x384xf32>
    %121 = arith.truncf %116 : vector<8x128xf32> to vector<8x128xbf16>
    %cst_39 = arith.constant dense<0.000000e+00> : vector<8x384xf32>
    %122 = tpu.matmul %121, %12, %cst_39 {dimension_numbers = #tpu.dot_dimension_numbers<[1], [0], [0], [1], [0, 0, 1, 1], [], []>} : vector<8x128xbf16>, vector<128x384xbf16>, vector<8x384xf32> -> vector<8x384xf32>
    %123 = vector.extract_strided_slice %120 {offsets = [0, 0], sizes = [8, 128], strides = [1, 1]} : vector<8x384xf32> to vector<8x128xf32>
    %124 = vector.extract_strided_slice %122 {offsets = [0, 0], sizes = [8, 128], strides = [1, 1]} : vector<8x384xf32> to vector<8x128xf32>
    %125 = arith.addf %123, %124 : vector<8x128xf32>
    %126 = arith.negf %125 : vector<8x128xf32>
    %127 = math.exp %126 : vector<8x128xf32>
    %cst_40 = arith.constant 1.000000e+00 : f32
    %128 = vector.broadcast %cst_40 : f32 to vector<8x128xf32>
    %129 = arith.addf %128, %127 : vector<8x128xf32>
    %130 = arith.divf %128, %129 : vector<8x128xf32>
    %131 = vector.extract_strided_slice %120 {offsets = [0, 128], sizes = [8, 128], strides = [1, 1]} : vector<8x384xf32> to vector<8x128xf32>
    %132 = vector.extract_strided_slice %122 {offsets = [0, 128], sizes = [8, 128], strides = [1, 1]} : vector<8x384xf32> to vector<8x128xf32>
    %133 = arith.addf %131, %132 : vector<8x128xf32>
    %134 = arith.negf %133 : vector<8x128xf32>
    %135 = math.exp %134 : vector<8x128xf32>
    %cst_41 = arith.constant 1.000000e+00 : f32
    %136 = vector.broadcast %cst_41 : f32 to vector<8x128xf32>
    %137 = arith.addf %136, %135 : vector<8x128xf32>
    %138 = arith.divf %136, %137 : vector<8x128xf32>
    %139 = vector.extract_strided_slice %120 {offsets = [0, 256], sizes = [8, 128], strides = [1, 1]} : vector<8x384xf32> to vector<8x128xf32>
    %140 = vector.extract_strided_slice %122 {offsets = [0, 256], sizes = [8, 128], strides = [1, 1]} : vector<8x384xf32> to vector<8x128xf32>
    %141 = vector.broadcast %13 : vector<1x128xf32> to vector<8x128xf32>
    %142 = arith.addf %140, %141 : vector<8x128xf32>
    %143 = arith.mulf %130, %142 : vector<8x128xf32>
    %144 = arith.addf %139, %143 : vector<8x128xf32>
    %145 = math.tanh %144 : vector<8x128xf32>
    %cst_42 = arith.constant 1.000000e+00 : f32
    %146 = vector.broadcast %cst_42 : f32 to vector<8x128xf32>
    %147 = arith.subf %146, %138 : vector<8x128xf32>
    %148 = arith.mulf %147, %145 : vector<8x128xf32>
    %149 = arith.mulf %138, %116 : vector<8x128xf32>
    %150 = arith.addf %148, %149 : vector<8x128xf32>
    %c4_i32 = arith.constant 4 : i32
    %c8_i32_43 = arith.constant 8 : i32
    %151 = arith.muli %c4_i32, %c8_i32_43 : i32
    %152 = tpu.assume_multiple %151, 8 : i32
    %153 = arith.index_cast %152 : i32 to index
    %c0_44 = arith.constant 0 : index
    %154 = vector.load %arg11[%153, %c0_44] : memref<64x384xf32, #tpu.memory_space<vmem>>, vector<8x384xf32>
    %155 = arith.truncf %150 : vector<8x128xf32> to vector<8x128xbf16>
    %cst_45 = arith.constant dense<0.000000e+00> : vector<8x384xf32>
    %156 = tpu.matmul %155, %12, %cst_45 {dimension_numbers = #tpu.dot_dimension_numbers<[1], [0], [0], [1], [0, 0, 1, 1], [], []>} : vector<8x128xbf16>, vector<128x384xbf16>, vector<8x384xf32> -> vector<8x384xf32>
    %157 = vector.extract_strided_slice %154 {offsets = [0, 0], sizes = [8, 128], strides = [1, 1]} : vector<8x384xf32> to vector<8x128xf32>
    %158 = vector.extract_strided_slice %156 {offsets = [0, 0], sizes = [8, 128], strides = [1, 1]} : vector<8x384xf32> to vector<8x128xf32>
    %159 = arith.addf %157, %158 : vector<8x128xf32>
    %160 = arith.negf %159 : vector<8x128xf32>
    %161 = math.exp %160 : vector<8x128xf32>
    %cst_46 = arith.constant 1.000000e+00 : f32
    %162 = vector.broadcast %cst_46 : f32 to vector<8x128xf32>
    %163 = arith.addf %162, %161 : vector<8x128xf32>
    %164 = arith.divf %162, %163 : vector<8x128xf32>
    %165 = vector.extract_strided_slice %154 {offsets = [0, 128], sizes = [8, 128], strides = [1, 1]} : vector<8x384xf32> to vector<8x128xf32>
    %166 = vector.extract_strided_slice %156 {offsets = [0, 128], sizes = [8, 128], strides = [1, 1]} : vector<8x384xf32> to vector<8x128xf32>
    %167 = arith.addf %165, %166 : vector<8x128xf32>
    %168 = arith.negf %167 : vector<8x128xf32>
    %169 = math.exp %168 : vector<8x128xf32>
    %cst_47 = arith.constant 1.000000e+00 : f32
    %170 = vector.broadcast %cst_47 : f32 to vector<8x128xf32>
    %171 = arith.addf %170, %169 : vector<8x128xf32>
    %172 = arith.divf %170, %171 : vector<8x128xf32>
    %173 = vector.extract_strided_slice %154 {offsets = [0, 256], sizes = [8, 128], strides = [1, 1]} : vector<8x384xf32> to vector<8x128xf32>
    %174 = vector.extract_strided_slice %156 {offsets = [0, 256], sizes = [8, 128], strides = [1, 1]} : vector<8x384xf32> to vector<8x128xf32>
    %175 = vector.broadcast %13 : vector<1x128xf32> to vector<8x128xf32>
    %176 = arith.addf %174, %175 : vector<8x128xf32>
    %177 = arith.mulf %164, %176 : vector<8x128xf32>
    %178 = arith.addf %173, %177 : vector<8x128xf32>
    %179 = math.tanh %178 : vector<8x128xf32>
    %cst_48 = arith.constant 1.000000e+00 : f32
    %180 = vector.broadcast %cst_48 : f32 to vector<8x128xf32>
    %181 = arith.subf %180, %172 : vector<8x128xf32>
    %182 = arith.mulf %181, %179 : vector<8x128xf32>
    %183 = arith.mulf %172, %150 : vector<8x128xf32>
    %184 = arith.addf %182, %183 : vector<8x128xf32>
    %c5_i32 = arith.constant 5 : i32
    %c8_i32_49 = arith.constant 8 : i32
    %185 = arith.muli %c5_i32, %c8_i32_49 : i32
    %186 = tpu.assume_multiple %185, 8 : i32
    %187 = arith.index_cast %186 : i32 to index
    %c0_50 = arith.constant 0 : index
    %188 = vector.load %arg11[%187, %c0_50] : memref<64x384xf32, #tpu.memory_space<vmem>>, vector<8x384xf32>
    %189 = arith.truncf %184 : vector<8x128xf32> to vector<8x128xbf16>
    %cst_51 = arith.constant dense<0.000000e+00> : vector<8x384xf32>
    %190 = tpu.matmul %189, %12, %cst_51 {dimension_numbers = #tpu.dot_dimension_numbers<[1], [0], [0], [1], [0, 0, 1, 1], [], []>} : vector<8x128xbf16>, vector<128x384xbf16>, vector<8x384xf32> -> vector<8x384xf32>
    %191 = vector.extract_strided_slice %188 {offsets = [0, 0], sizes = [8, 128], strides = [1, 1]} : vector<8x384xf32> to vector<8x128xf32>
    %192 = vector.extract_strided_slice %190 {offsets = [0, 0], sizes = [8, 128], strides = [1, 1]} : vector<8x384xf32> to vector<8x128xf32>
    %193 = arith.addf %191, %192 : vector<8x128xf32>
    %194 = arith.negf %193 : vector<8x128xf32>
    %195 = math.exp %194 : vector<8x128xf32>
    %cst_52 = arith.constant 1.000000e+00 : f32
    %196 = vector.broadcast %cst_52 : f32 to vector<8x128xf32>
    %197 = arith.addf %196, %195 : vector<8x128xf32>
    %198 = arith.divf %196, %197 : vector<8x128xf32>
    %199 = vector.extract_strided_slice %188 {offsets = [0, 128], sizes = [8, 128], strides = [1, 1]} : vector<8x384xf32> to vector<8x128xf32>
    %200 = vector.extract_strided_slice %190 {offsets = [0, 128], sizes = [8, 128], strides = [1, 1]} : vector<8x384xf32> to vector<8x128xf32>
    %201 = arith.addf %199, %200 : vector<8x128xf32>
    %202 = arith.negf %201 : vector<8x128xf32>
    %203 = math.exp %202 : vector<8x128xf32>
    %cst_53 = arith.constant 1.000000e+00 : f32
    %204 = vector.broadcast %cst_53 : f32 to vector<8x128xf32>
    %205 = arith.addf %204, %203 : vector<8x128xf32>
    %206 = arith.divf %204, %205 : vector<8x128xf32>
    %207 = vector.extract_strided_slice %188 {offsets = [0, 256], sizes = [8, 128], strides = [1, 1]} : vector<8x384xf32> to vector<8x128xf32>
    %208 = vector.extract_strided_slice %190 {offsets = [0, 256], sizes = [8, 128], strides = [1, 1]} : vector<8x384xf32> to vector<8x128xf32>
    %209 = vector.broadcast %13 : vector<1x128xf32> to vector<8x128xf32>
    %210 = arith.addf %208, %209 : vector<8x128xf32>
    %211 = arith.mulf %198, %210 : vector<8x128xf32>
    %212 = arith.addf %207, %211 : vector<8x128xf32>
    %213 = math.tanh %212 : vector<8x128xf32>
    %cst_54 = arith.constant 1.000000e+00 : f32
    %214 = vector.broadcast %cst_54 : f32 to vector<8x128xf32>
    %215 = arith.subf %214, %206 : vector<8x128xf32>
    %216 = arith.mulf %215, %213 : vector<8x128xf32>
    %217 = arith.mulf %206, %184 : vector<8x128xf32>
    %218 = arith.addf %216, %217 : vector<8x128xf32>
    %c6_i32 = arith.constant 6 : i32
    %c8_i32_55 = arith.constant 8 : i32
    %219 = arith.muli %c6_i32, %c8_i32_55 : i32
    %220 = tpu.assume_multiple %219, 8 : i32
    %221 = arith.index_cast %220 : i32 to index
    %c0_56 = arith.constant 0 : index
    %222 = vector.load %arg11[%221, %c0_56] : memref<64x384xf32, #tpu.memory_space<vmem>>, vector<8x384xf32>
    %223 = arith.truncf %218 : vector<8x128xf32> to vector<8x128xbf16>
    %cst_57 = arith.constant dense<0.000000e+00> : vector<8x384xf32>
    %224 = tpu.matmul %223, %12, %cst_57 {dimension_numbers = #tpu.dot_dimension_numbers<[1], [0], [0], [1], [0, 0, 1, 1], [], []>} : vector<8x128xbf16>, vector<128x384xbf16>, vector<8x384xf32> -> vector<8x384xf32>
    %225 = vector.extract_strided_slice %222 {offsets = [0, 0], sizes = [8, 128], strides = [1, 1]} : vector<8x384xf32> to vector<8x128xf32>
    %226 = vector.extract_strided_slice %224 {offsets = [0, 0], sizes = [8, 128], strides = [1, 1]} : vector<8x384xf32> to vector<8x128xf32>
    %227 = arith.addf %225, %226 : vector<8x128xf32>
    %228 = arith.negf %227 : vector<8x128xf32>
    %229 = math.exp %228 : vector<8x128xf32>
    %cst_58 = arith.constant 1.000000e+00 : f32
    %230 = vector.broadcast %cst_58 : f32 to vector<8x128xf32>
    %231 = arith.addf %230, %229 : vector<8x128xf32>
    %232 = arith.divf %230, %231 : vector<8x128xf32>
    %233 = vector.extract_strided_slice %222 {offsets = [0, 128], sizes = [8, 128], strides = [1, 1]} : vector<8x384xf32> to vector<8x128xf32>
    %234 = vector.extract_strided_slice %224 {offsets = [0, 128], sizes = [8, 128], strides = [1, 1]} : vector<8x384xf32> to vector<8x128xf32>
    %235 = arith.addf %233, %234 : vector<8x128xf32>
    %236 = arith.negf %235 : vector<8x128xf32>
    %237 = math.exp %236 : vector<8x128xf32>
    %cst_59 = arith.constant 1.000000e+00 : f32
    %238 = vector.broadcast %cst_59 : f32 to vector<8x128xf32>
    %239 = arith.addf %238, %237 : vector<8x128xf32>
    %240 = arith.divf %238, %239 : vector<8x128xf32>
    %241 = vector.extract_strided_slice %222 {offsets = [0, 256], sizes = [8, 128], strides = [1, 1]} : vector<8x384xf32> to vector<8x128xf32>
    %242 = vector.extract_strided_slice %224 {offsets = [0, 256], sizes = [8, 128], strides = [1, 1]} : vector<8x384xf32> to vector<8x128xf32>
    %243 = vector.broadcast %13 : vector<1x128xf32> to vector<8x128xf32>
    %244 = arith.addf %242, %243 : vector<8x128xf32>
    %245 = arith.mulf %232, %244 : vector<8x128xf32>
    %246 = arith.addf %241, %245 : vector<8x128xf32>
    %247 = math.tanh %246 : vector<8x128xf32>
    %cst_60 = arith.constant 1.000000e+00 : f32
    %248 = vector.broadcast %cst_60 : f32 to vector<8x128xf32>
    %249 = arith.subf %248, %240 : vector<8x128xf32>
    %250 = arith.mulf %249, %247 : vector<8x128xf32>
    %251 = arith.mulf %240, %218 : vector<8x128xf32>
    %252 = arith.addf %250, %251 : vector<8x128xf32>
    %c7_i32 = arith.constant 7 : i32
    %c8_i32_61 = arith.constant 8 : i32
    %253 = arith.muli %c7_i32, %c8_i32_61 : i32
    %254 = tpu.assume_multiple %253, 8 : i32
    %255 = arith.index_cast %254 : i32 to index
    %c0_62 = arith.constant 0 : index
    %256 = vector.load %arg11[%255, %c0_62] : memref<64x384xf32, #tpu.memory_space<vmem>>, vector<8x384xf32>
    %257 = arith.truncf %252 : vector<8x128xf32> to vector<8x128xbf16>
    %cst_63 = arith.constant dense<0.000000e+00> : vector<8x384xf32>
    %258 = tpu.matmul %257, %12, %cst_63 {dimension_numbers = #tpu.dot_dimension_numbers<[1], [0], [0], [1], [0, 0, 1, 1], [], []>} : vector<8x128xbf16>, vector<128x384xbf16>, vector<8x384xf32> -> vector<8x384xf32>
    %259 = vector.extract_strided_slice %256 {offsets = [0, 0], sizes = [8, 128], strides = [1, 1]} : vector<8x384xf32> to vector<8x128xf32>
    %260 = vector.extract_strided_slice %258 {offsets = [0, 0], sizes = [8, 128], strides = [1, 1]} : vector<8x384xf32> to vector<8x128xf32>
    %261 = arith.addf %259, %260 : vector<8x128xf32>
    %262 = arith.negf %261 : vector<8x128xf32>
    %263 = math.exp %262 : vector<8x128xf32>
    %cst_64 = arith.constant 1.000000e+00 : f32
    %264 = vector.broadcast %cst_64 : f32 to vector<8x128xf32>
    %265 = arith.addf %264, %263 : vector<8x128xf32>
    %266 = arith.divf %264, %265 : vector<8x128xf32>
    %267 = vector.extract_strided_slice %256 {offsets = [0, 128], sizes = [8, 128], strides = [1, 1]} : vector<8x384xf32> to vector<8x128xf32>
    %268 = vector.extract_strided_slice %258 {offsets = [0, 128], sizes = [8, 128], strides = [1, 1]} : vector<8x384xf32> to vector<8x128xf32>
    %269 = arith.addf %267, %268 : vector<8x128xf32>
    %270 = arith.negf %269 : vector<8x128xf32>
    %271 = math.exp %270 : vector<8x128xf32>
    %cst_65 = arith.constant 1.000000e+00 : f32
    %272 = vector.broadcast %cst_65 : f32 to vector<8x128xf32>
    %273 = arith.addf %272, %271 : vector<8x128xf32>
    %274 = arith.divf %272, %273 : vector<8x128xf32>
    %275 = vector.extract_strided_slice %256 {offsets = [0, 256], sizes = [8, 128], strides = [1, 1]} : vector<8x384xf32> to vector<8x128xf32>
    %276 = vector.extract_strided_slice %258 {offsets = [0, 256], sizes = [8, 128], strides = [1, 1]} : vector<8x384xf32> to vector<8x128xf32>
    %277 = vector.broadcast %13 : vector<1x128xf32> to vector<8x128xf32>
    %278 = arith.addf %276, %277 : vector<8x128xf32>
    %279 = arith.mulf %266, %278 : vector<8x128xf32>
    %280 = arith.addf %275, %279 : vector<8x128xf32>
    %281 = math.tanh %280 : vector<8x128xf32>
    %cst_66 = arith.constant 1.000000e+00 : f32
    %282 = vector.broadcast %cst_66 : f32 to vector<8x128xf32>
    %283 = arith.subf %282, %274 : vector<8x128xf32>
    %284 = arith.mulf %283, %281 : vector<8x128xf32>
    %285 = arith.mulf %274, %252 : vector<8x128xf32>
    %286 = arith.addf %284, %285 : vector<8x128xf32>
    %c8_i32_67 = arith.constant 8 : i32
    %c0_68 = arith.constant 0 : index
    %c0_69 = arith.constant 0 : index
    %287 = vector.load %arg8[%c0_68, %c0_69] : memref<8x128xf32, #tpu.memory_space<vmem>>, vector<8x128xf32>
    tpu.vector_store %arg8[%c0_68, %c0_69], %286 {strides = array<i32>} : memref<8x128xf32, #tpu.memory_space<vmem>>, vector<8x128xf32>,
    return
  }
  func.func @transform_0(%arg0: i32, %arg1: memref<64xi32, #tpu.memory_space<smem>>) -> (i32, i32) {
    %c0_i32 = arith.constant 0 : i32
    %c0_i32_0 = arith.constant 0 : i32
    %c0_i32_1 = arith.constant 0 : i32
    return %c0_i32, %c0_i32_0 : i32, i32
  }
  func.func @transform_1(%arg0: i32, %arg1: memref<64xi32, #tpu.memory_space<smem>>) -> (i32, i32) {
    %c0_i32 = arith.constant 0 : i32
    %c0_i32_0 = arith.constant 0 : i32
    %c0_i32_1 = arith.constant 0 : i32
    return %c0_i32, %c0_i32_0 : i32, i32
  }
  func.func @transform_2(%arg0: i32, %arg1: memref<64xi32, #tpu.memory_space<smem>>) -> (i32, i32) {
    %c0_i32 = arith.constant 0 : i32
    %c0_i32_0 = arith.constant 0 : i32
    %c0_i32_1 = arith.constant 0 : i32
    return %c0_i32, %c0_i32_0 : i32, i32
  }
  func.func @transform_3(%arg0: i32, %arg1: memref<64xi32, #tpu.memory_space<smem>>) -> (i32, i32) {
    %c0_i32 = arith.constant 0 : i32
    %c0_i32_0 = arith.constant 0 : i32
    %c0_i32_1 = arith.constant 0 : i32
    return %c0_i32, %c0_i32_0 : i32, i32
  }
  func.func @transform_4(%arg0: i32, %arg1: memref<64xi32, #tpu.memory_space<smem>>) -> (i32, i32) {
    %c0_i32 = arith.constant 0 : i32
    %c0_i32_0 = arith.constant 0 : i32
    %c0_i32_1 = arith.constant 0 : i32
    return %c0_i32, %c0_i32_0 : i32, i32
  }
  func.func @transform_5(%arg0: i32, %arg1: memref<64xi32, #tpu.memory_space<smem>>) -> (i32, i32) {
    %c0_i32 = arith.constant 0 : i32
    %c0_i32_0 = arith.constant 0 : i32
    %c0_i32_1 = arith.constant 0 : i32
    return %c0_i32, %c0_i32_0 : i32, i32
  }
  func.func @transform_6(%arg0: i32, %arg1: memref<64xi32, #tpu.memory_space<smem>>) -> (i32, i32) {
    %c0_i32 = arith.constant 0 : i32
    %c0_i32_0 = arith.constant 0 : i32
    %c0_i32_1 = arith.constant 0 : i32
    return %c0_i32, %c0_i32_0 : i32, i32
  }
}

</mosaic_0001>

<llo_original>
// kernel: tpu_custom_call.1
$region0: #{tpu_custom_call.1}
  #allocation0 [shape = 'u32[]', space=smem, size = 0x4, offset = 0x4, fixed_abs, tag = 'smem constant byte address 0x4 - core index']
  #allocation1 [shape = 'u32[72,128]{1,0:T(1,128)}', space=vmem, size = 0x9000, scoped, tag = 'internal scratch']
  #allocation2 [shape = 'f32[64,128]{1,0:T(8,128)}', space=vmem, size = 0x8000, scoped, tag = 'scratch operand']
  #allocation3 [shape = 'f32[64,128]{1,0:T(8,128)}', space=vmem, size = 0x8000, scoped, tag = 'scratch operand']
  #allocation4 [shape = 'f32[64,384]{1,0:T(8,128)}', space=vmem, size = 0x18000, scoped, tag = 'scratch operand']
  #allocation5 [shape = 's32[1]{0}', space=sflag, size = 0x4, scoped, tag = 'scoped memory for tpu_custom_call.1']
  #allocation6 [shape = 'u8[512]{0}', space=smem, size = 0x200, scoped, tag = 'prefetched SMEM operand 0']
  %s0 = inlined_call_operand.hbm [shape: s32[64], index: 0, kind: input, shape index: {}]
  %s1 = inlined_call_operand.hbm [shape: bf16[64,128], index: 1, kind: input, shape index: {}]
  %s2 = inlined_call_operand.hbm [shape: f32[568,128], index: 2, kind: input, shape index: {}]
  %s3 = inlined_call_operand.hbm [shape: bf16[128,384], index: 3, kind: input, shape index: {}]
  %s4 = inlined_call_operand.hbm [shape: bf16[128,384], index: 4, kind: input, shape index: {}]
  %s5 = inlined_call_operand.vmem [shape: f32[1,384], index: 5, kind: input, shape index: {}]
  %s6 = inlined_call_operand.vmem [shape: f32[1,128], index: 6, kind: input, shape index: {}]
  %s7 = inlined_call_operand.hbm [shape: f32[8,128], index: 7, kind: output, shape index: {}]
  %s8 = sld [smem:[#allocation0]]
  $region64: #{tpu_custom_call.1} parent=0
    _
  %s10 = ssub.s32 1, %s8
  %s11 = scalar_select 0, %s10, %s8
  %s13 = sshll.u32 %s0, 4
  %s14 = int_to_ptr.hbm [resolvable:$true] %s13
  %16 = dma.hbm_to_smem %s14, 16, [#allocation6], [#allocation5]
  %18 = dma.done [#allocation5], 16
  %19 = sfence
  $region1: #{tpu_custom_call.1} parent=0
    #allocation7 [shape = 'u8[16384]{0}', space=vmem, size = 0x4000, scoped, tag = 'input window, operand 1, single buffered']
    #allocation8 [shape = 's32[1]{0}', space=sflag, size = 0x4, scoped, tag = 'scoped memory for tpu_custom_call.1']
    #allocation9 [shape = 's32[1]{0}', space=sflag, size = 0x4, scoped, tag = 'scoped memory for tpu_custom_call.1']
    #allocation10 [shape = 'u8[290816]{0}', space=vmem, size = 0x47000, scoped, tag = 'input window, operand 2, single buffered']
    #allocation11 [shape = 's32[1]{0}', space=sflag, size = 0x4, scoped, tag = 'scoped memory for tpu_custom_call.1']
    #allocation12 [shape = 'u8[98304]{0}', space=vmem, size = 0x18000, scoped, tag = 'input window, operand 3, single buffered']
    #allocation13 [shape = 'u8[98304]{0}', space=vmem, size = 0x18000, scoped, tag = 'input window, operand 4, single buffered']
    #allocation14 [shape = 's32[1]{0}', space=sflag, size = 0x4, scoped, tag = 'scoped memory for tpu_custom_call.1']
    #allocation15 [shape = 'u8[4096]{0}', space=vmem, size = 0x1000, scoped, tag = 'output window, operand 0, single buffered']
    %20 = vsyncpa [#allocation8], 0
    %21 = vsyncpa [#allocation11], 0
    %22 = vsyncpa [#allocation14], 0
    %23 = vsyncpa [#allocation9], 0
    // Predicated region
    $region2: #{tpu_custom_call.1} parent=1 // pred_check
      _
    $region3: #{tpu_custom_call.1} parent=1 // pred_check_branch
      %25 = sbr.rel (0) target = $region5
    $region4: #{tpu_custom_call.1} parent=1 // pred_region
      %27 = vsyncadd [#allocation8], 0
      %s28 = sshll.u32 %s1, 4
      %s29 = int_to_ptr.hbm [resolvable:$true] %s28
      %s30 = sshll.u32 [#allocation7], 4
      %s31 = int_to_ptr.vmem [resolvable:$true] %s30
      %36 = dma.hbm_to_vmem [thread:$0]  %s29, 512, %s31, [#allocation8], 64, 64, 4
    $region5: #{tpu_custom_call.1} parent=1 // pred_fallthru
      _
    // Predicated region
    $region6: #{tpu_custom_call.1} parent=1 // pred_check
      _
    $region7: #{tpu_custom_call.1} parent=1 // pred_check_branch
      %38 = sbr.rel (0) target = $region9
    $region8: #{tpu_custom_call.1} parent=1 // pred_region
      %40 = vsyncadd [#allocation11], 0
      %s41 = sshll.u32 %s2, 4
      %s42 = int_to_ptr.hbm [resolvable:$true] %s41
      %s43 = sshll.u32 [#allocation10], 4
      %s44 = int_to_ptr.vmem [resolvable:$true] %s43
      %49 = dma.hbm_to_vmem [thread:$0]  %s42, 9088, %s44, [#allocation11], 128, 128, 8
    $region9: #{tpu_custom_call.1} parent=1 // pred_fallthru
      _
    // Predicated region
    $region10: #{tpu_custom_call.1} parent=1 // pred_check
      _
    $region11: #{tpu_custom_call.1} parent=1 // pred_check_branch
      %51 = sbr.rel (0) target = $region13
    $region12: #{tpu_custom_call.1} parent=1 // pred_region
      %53 = vsyncadd [#allocation11], 0
      %s54 = sshll.u32 %s3, 4
      %s55 = int_to_ptr.hbm [resolvable:$true] %s54
      %s56 = sshll.u32 [#allocation12], 4
      %s57 = int_to_ptr.vmem [resolvable:$true] %s56
      %62 = dma.hbm_to_vmem [thread:$0]  %s55, 3072, %s57, [#allocation11], 192, 192, 12
    $region13: #{tpu_custom_call.1} parent=1 // pred_fallthru
      _
    // Predicated region
    $region14: #{tpu_custom_call.1} parent=1 // pred_check
      _
    $region15: #{tpu_custom_call.1} parent=1 // pred_check_branch
      %64 = sbr.rel (0) target = $region17
    $region16: #{tpu_custom_call.1} parent=1 // pred_region
      %66 = vsyncadd [#allocation14], 0
      %s67 = sshll.u32 %s4, 4
      %s68 = int_to_ptr.hbm [resolvable:$true] %s67
      %s69 = sshll.u32 [#allocation13], 4
      %s70 = int_to_ptr.vmem [resolvable:$true] %s69
      %75 = dma.hbm_to_vmem [thread:$0]  %s68, 3072, %s70, [#allocation14], 192, 192, 12
    $region17: #{tpu_custom_call.1} parent=1 // pred_fallthru
      _
    // Predicated region
    $region18: #{tpu_custom_call.1} parent=1 // pred_check
      _
    $region19: #{tpu_custom_call.1} parent=1 // pred_check_branch
      %77 = sbr.rel (0) target = $region21
    $region20: #{tpu_custom_call.1} parent=1 // pred_region
      _
    $region21: #{tpu_custom_call.1} parent=1 // pred_fallthru
      _
    // Predicated region
    $region22: #{tpu_custom_call.1} parent=1 // pred_check
      _
    $region23: #{tpu_custom_call.1} parent=1 // pred_check_branch
      %79 = sbr.rel (0) target = $region25
    $region24: #{tpu_custom_call.1} parent=1 // pred_region
      _
    $region25: #{tpu_custom_call.1} parent=1 // pred_fallthru
      _
    // Predicated region
    $region26: #{tpu_custom_call.1} parent=1 // pred_check
      _
    $region27: #{tpu_custom_call.1} parent=1 // pred_check_branch
      %81 = sbr.rel (0) target = $region29
    $region28: #{tpu_custom_call.1} parent=1 // pred_region
      %83 = dma.done [#allocation8], 512
    $region29: #{tpu_custom_call.1} parent=1 // pred_fallthru
      _
    // Predicated region
    $region30: #{tpu_custom_call.1} parent=1 // pred_check
      _
    $region31: #{tpu_custom_call.1} parent=1 // pred_check_branch
      %85 = sbr.rel (0) target = $region33
    $region32: #{tpu_custom_call.1} parent=1 // pred_region
      %87 = dma.done [#allocation11], 9088
    $region33: #{tpu_custom_call.1} parent=1 // pred_fallthru
      _
    // Predicated region
    $region34: #{tpu_custom_call.1} parent=1 // pred_check
      _
    $region35: #{tpu_custom_call.1} parent=1 // pred_check_branch
      %89 = sbr.rel (0) target = $region37
    $region36: #{tpu_custom_call.1} parent=1 // pred_region
      %91 = dma.done [#allocation11], 3072
    $region37: #{tpu_custom_call.1} parent=1 // pred_fallthru
      _
    // Predicated region
    $region38: #{tpu_custom_call.1} parent=1 // pred_check
      _
    $region39: #{tpu_custom_call.1} parent=1 // pred_check_branch
      %93 = sbr.rel (0) target = $region41
    $region40: #{tpu_custom_call.1} parent=1 // pred_region
      %95 = dma.done [#allocation14], 3072
    $region41: #{tpu_custom_call.1} parent=1 // pred_fallthru
      _
    %v97 = vld [vmem:[#allocation7] sm:$0xf]
    %v98 = vld [vmem:[#allocation7 + $0x4] sm:$0xf]
    %v99 = vld [vmem:[#allocation7 + $0x8] sm:$0xf]
    %v100 = vld [vmem:[#allocation7 + $0xc] sm:$0xf]
    %v101 = vld [vmem:[#allocation7 + $0x10] sm:$0xf]
    %v102 = vld [vmem:[#allocation7 + $0x14] sm:$0xf]
    %v103 = vld [vmem:[#allocation7 + $0x18] sm:$0xf]
    %v104 = vld [vmem:[#allocation7 + $0x1c] sm:$0xf]
    %v105 = vunpack.c.l.bf16 %v97
    %v106 = vunpack.c.l.bf16 %v98
    %v107 = vunpack.c.l.bf16 %v99
    %v108 = vunpack.c.l.bf16 %v100
    %v109 = vunpack.c.l.bf16 %v101
    %v110 = vunpack.c.l.bf16 %v102
    %v111 = vunpack.c.l.bf16 %v103
    %v112 = vunpack.c.l.bf16 %v104
    %113 = vst [vmem:[#allocation2] sm:$0xff] %v105
    %114 = vst [vmem:[#allocation2 + $0x8] sm:$0xff] %v106
    %115 = vst [vmem:[#allocation2 + $0x10] sm:$0xff] %v107
    %116 = vst [vmem:[#allocation2 + $0x18] sm:$0xff] %v108
    %117 = vst [vmem:[#allocation2 + $0x20] sm:$0xff] %v109
    %118 = vst [vmem:[#allocation2 + $0x28] sm:$0xff] %v110
    %119 = vst [vmem:[#allocation2 + $0x30] sm:$0xff] %v111
    %120 = vst [vmem:[#allocation2 + $0x38] sm:$0xff] %v112
    loop: start=0, step=1, limit=8
    $region42: #{tpu_custom_call.1} parent=1 // loop_pre_header
      _
    $region43: #{tpu_custom_call.1} parent=1 // loop_header
      %s122 = sphi 0, %s126
      %p123 = scmp.ge.s32.totalorder %s122, 8
    $region44: #{tpu_custom_call.1} parent=1 // loop_header_branch
      %125 = sbr.rel (%p123) target = $region48
    $region45: #{tpu_custom_call.1} parent=1 // loop_body
      loop: start=0, step=1, limit=8
      $region49: #{tpu_custom_call.1} parent=45 // loop_pre_header
        _
      $region50: #{tpu_custom_call.1} parent=45 // loop_header
        %s128 = sphi 0, %s132
        %p129 = scmp.ge.s32.totalorder %s128, 8
      $region51: #{tpu_custom_call.1} parent=45 // loop_header_branch
        %131 = sbr.rel (%p129) target = $region55
      $region52: #{tpu_custom_call.1} parent=45 // loop_body
        %s133 = smul.u32 %s122, 8
        %s134 = sadd.s32 %s133, %s128
        %s135 = smul.u32 %s128, 8
        %s136 = sadd.s32 %s135, %s122
        %s137 = sld [smem:[#allocation6 + %s134]]
        %s138 = scalar_lea.vmem [#allocation2], %s134
        %v139 = vld [vmem:[%s138] sm:$0x1]
        %s140 = scalar_lea.vmem [#allocation10], %s137
        %v141 = vld [vmem:[%s140] sm:$0x1]
        %v142 = vadd.f32 %v139, %v141
        %s143 = scalar_lea.vmem [#allocation3], %s136
        %144 = vst [vmem:[%s143] sm:$0x1] %v142
      $region53: #{tpu_custom_call.1} parent=45 // loop_footer
        %s132 = sadd.s32 1, %s128
      $region54: #{tpu_custom_call.1} parent=45 // loop_footer_branch
        %127 = sbr.rel target = $region50
      $region55: #{tpu_custom_call.1} parent=45 // loop_exit
        _
    $region46: #{tpu_custom_call.1} parent=1 // loop_footer
      %s126 = sadd.s32 1, %s122
    $region47: #{tpu_custom_call.1} parent=1 // loop_footer_branch
      %121 = sbr.rel target = $region43
    $region48: #{tpu_custom_call.1} parent=1 // loop_exit
      _
    %v145 = vld [vmem:[#allocation3] sm:$0xff]
    %v146 = vld [vmem:[#allocation3 + $0x8] sm:$0xff]
    %v147 = vld [vmem:[#allocation3 + $0x10] sm:$0xff]
    %v148 = vld [vmem:[#allocation3 + $0x18] sm:$0xff]
    %v149 = vld [vmem:[#allocation3 + $0x20] sm:$0xff]
    %v150 = vld [vmem:[#allocation3 + $0x28] sm:$0xff]
    %v151 = vld [vmem:[#allocation3 + $0x30] sm:$0xff]
    %v152 = vld [vmem:[#allocation3 + $0x38] sm:$0xff]
    %v153 = vpack.c.bf16 %v146, %v145
    %v154 = vpack.c.bf16 %v148, %v147
    %v155 = vpack.c.bf16 %v150, %v149
    %v156 = vpack.c.bf16 %v152, %v151
    %v157 = vld [vmem:[#allocation12] sm:$0xff]
    %v158 = vld [vmem:[#allocation12 + $0x8] sm:$0xf]
    %v159 = vld [vmem:[#allocation12 + $0xc] sm:$0xff]
    %v160 = vld [vmem:[#allocation12 + $0x14] sm:$0xf]
    %v161 = vld [vmem:[#allocation12 + $0x18] sm:$0xff]
    %v162 = vld [vmem:[#allocation12 + $0x20] sm:$0xf]
    %v163 = vld [vmem:[#allocation12 + $0x24] sm:$0xff]
    %v164 = vld [vmem:[#allocation12 + $0x2c] sm:$0xf]
    %v165 = vld [vmem:[#allocation12 + $0x30] sm:$0xff]
    %v166 = vld [vmem:[#allocation12 + $0x38] sm:$0xf]
    %v167 = vld [vmem:[#allocation12 + $0x3c] sm:$0xff]
    %v168 = vld [vmem:[#allocation12 + $0x44] sm:$0xf]
    %v169 = vld [vmem:[#allocation12 + $0x48] sm:$0xff]
    %v170 = vld [vmem:[#allocation12 + $0x50] sm:$0xf]
    %v171 = vld [vmem:[#allocation12 + $0x54] sm:$0xff]
    %v172 = vld [vmem:[#allocation12 + $0x5c] sm:$0xf]
    %v173 = vld [vmem:[#allocation12 + $0x60] sm:$0xff]
    %v174 = vld [vmem:[#allocation12 + $0x68] sm:$0xf]
    %v175 = vld [vmem:[#allocation12 + $0x6c] sm:$0xff]
    %v176 = vld [vmem:[#allocation12 + $0x74] sm:$0xf]
    %v177 = vld [vmem:[#allocation12 + $0x78] sm:$0xff]
    %v178 = vld [vmem:[#allocation12 + $0x80] sm:$0xf]
    %v179 = vld [vmem:[#allocation12 + $0x84] sm:$0xff]
    %v180 = vld [vmem:[#allocation12 + $0x8c] sm:$0xf]
    %v181 = vld [vmem:[#allocation12 + $0x90] sm:$0xff]
    %v182 = vld [vmem:[#allocation12 + $0x98] sm:$0xf]
    %v183 = vld [vmem:[#allocation12 + $0x9c] sm:$0xff]
    %v184 = vld [vmem:[#allocation12 + $0xa4] sm:$0xf]
    %v185 = vld [vmem:[#allocation12 + $0xa8] sm:$0xff]
    %v186 = vld [vmem:[#allocation12 + $0xb0] sm:$0xf]
    %v187 = vld [vmem:[#allocation12 + $0xb4] sm:$0xff]
    %v188 = vld [vmem:[#allocation12 + $0xbc] sm:$0xf]
    %v189 = vld [vmem:[%s5] sm:$0x7]
    %v191 = vperm.slane %v189, 0
    %v192 = vperm.slane %v189, 1
    %v193 = vperm.slane %v189, 2
    %v229 = vunpack.c.l.b16 %v157
    %v230 = vunpack.c.h.b16 %v157
    %v231 = vunpack.c.l.b16 %v158
    %v232 = vunpack.c.l.b16 %v159
    %v233 = vunpack.c.h.b16 %v159
    %v234 = vunpack.c.l.b16 %v160
    %v235 = vunpack.c.l.b16 %v161
    %v236 = vunpack.c.h.b16 %v161
    %v237 = vunpack.c.l.b16 %v162
    %v238 = vunpack.c.l.b16 %v163
    %v239 = vunpack.c.h.b16 %v163
    %v240 = vunpack.c.l.b16 %v164
    %v241 = vunpack.c.l.b16 %v165
    %v242 = vunpack.c.h.b16 %v165
    %v243 = vunpack.c.l.b16 %v166
    %v244 = vunpack.c.l.b16 %v167
    %v245 = vunpack.c.h.b16 %v167
    %v246 = vunpack.c.l.b16 %v168
    %v247 = vunpack.c.l.b16 %v169
    %v248 = vunpack.c.h.b16 %v169
    %v249 = vunpack.c.l.b16 %v170
    %v250 = vunpack.c.l.b16 %v171
    %v251 = vunpack.c.h.b16 %v171
    %v252 = vunpack.c.l.b16 %v172
    %v253 = vunpack.c.l.b16 %v173
    %v254 = vunpack.c.h.b16 %v173
    %v255 = vunpack.c.l.b16 %v174
    %v256 = vunpack.c.l.b16 %v175
    %v257 = vunpack.c.h.b16 %v175
    %v258 = vunpack.c.l.b16 %v176
    %v259 = vunpack.c.l.b16 %v177
    %v260 = vunpack.c.h.b16 %v177
    %v261 = vunpack.c.l.b16 %v178
    %v262 = vunpack.c.l.b16 %v179
    %v263 = vunpack.c.h.b16 %v179
    %v264 = vunpack.c.l.b16 %v180
    %v265 = vunpack.c.l.b16 %v181
    %v266 = vunpack.c.h.b16 %v181
    %v267 = vunpack.c.l.b16 %v182
    %v268 = vunpack.c.l.b16 %v183
    %v269 = vunpack.c.h.b16 %v183
    %v270 = vunpack.c.l.b16 %v184
    %v271 = vunpack.c.l.b16 %v185
    %v272 = vunpack.c.h.b16 %v185
    %v273 = vunpack.c.l.b16 %v186
    %v274 = vunpack.c.l.b16 %v187
    %v275 = vunpack.c.h.b16 %v187
    %v276 = vunpack.c.l.b16 %v188
    %v277 = vpack.c.b16 %v232, %v229
    %v278 = vpack.c.b16 %v233, %v230
    %v279 = vpack.c.b16 %v234, %v231
    %v280 = vpack.c.b16 %v238, %v235
    %v281 = vpack.c.b16 %v239, %v236
    %v282 = vpack.c.b16 %v240, %v237
    %v283 = vpack.c.b16 %v244, %v241
    %v284 = vpack.c.b16 %v245, %v242
    %v285 = vpack.c.b16 %v246, %v243
    %v286 = vpack.c.b16 %v250, %v247
    %v287 = vpack.c.b16 %v251, %v248
    %v288 = vpack.c.b16 %v252, %v249
    %v289 = vpack.c.b16 %v256, %v253
    %v290 = vpack.c.b16 %v257, %v254
    %v291 = vpack.c.b16 %v258, %v255
    %v292 = vpack.c.b16 %v262, %v259
    %v293 = vpack.c.b16 %v263, %v260
    %v294 = vpack.c.b16 %v264, %v261
    %v295 = vpack.c.b16 %v268, %v265
    %v296 = vpack.c.b16 %v269, %v266
    %v297 = vpack.c.b16 %v270, %v267
    %v298 = vpack.c.b16 %v274, %v271
    %v299 = vpack.c.b16 %v275, %v272
    %v300 = vpack.c.b16 %v276, %v273
    %325 = vmatpush.bf16.msra.mxu0 %v298
    %326 = vmatpush.bf16.msra.mxu0 %v295
    %327 = vmatpush.bf16.msra.mxu0 %v292
    %328 = vmatpush.bf16.msra.mxu0 %v289
    %329 = vmatpush.bf16.msra.mxu0 %v286
    %330 = vmatpush.bf16.msra.mxu0 %v283
    %331 = vmatpush.bf16.msra.mxu0 %v280
    %332 = vmatpush.bf16.msra.mxu0 %v277
    %333 = vmatmul.bf16.gmra.mxu0 %v153
    %v334 = vpop.f32.mrf.mxu0
    %v335 = vadd.f32 %v191, %v334
    %v336 = vpop.f32.mrf.mxu0
    %v337 = vadd.f32 %v191, %v336
    %338 = vmatmul.bf16.gmra.mxu0 %v154
    %v339 = vpop.f32.mrf.mxu0
    %v340 = vadd.f32 %v191, %v339
    %v341 = vpop.f32.mrf.mxu0
    %v342 = vadd.f32 %v191, %v341
    %343 = vmatmul.bf16.gmra.mxu0 %v155
    %v344 = vpop.f32.mrf.mxu0
    %v345 = vadd.f32 %v191, %v344
    %v346 = vpop.f32.mrf.mxu0
    %v347 = vadd.f32 %v191, %v346
    %348 = vmatmul.bf16.gmra.mxu0 %v156
    %v349 = vpop.f32.mrf.mxu0
    %v350 = vadd.f32 %v191, %v349
    %v351 = vpop.f32.mrf.mxu0
    %v352 = vadd.f32 %v191, %v351
    %353 = vdwg.mxu0
    %354 = vmatpush.bf16.msra.mxu0 %v299
    %355 = vmatpush.bf16.msra.mxu0 %v296
    %356 = vmatpush.bf16.msra.mxu0 %v293
    %357 = vmatpush.bf16.msra.mxu0 %v290
    %358 = vmatpush.bf16.msra.mxu0 %v287
    %359 = vmatpush.bf16.msra.mxu0 %v284
    %360 = vmatpush.bf16.msra.mxu0 %v281
    %361 = vmatpush.bf16.msra.mxu0 %v278
    %362 = vmatmul.bf16.gmra.mxu0 %v153
    %v363 = vpop.f32.mrf.mxu0
    %v364 = vadd.f32 %v192, %v363
    %v365 = vpop.f32.mrf.mxu0
    %v366 = vadd.f32 %v192, %v365
    %367 = vmatmul.bf16.gmra.mxu0 %v154
    %v368 = vpop.f32.mrf.mxu0
    %v369 = vadd.f32 %v192, %v368
    %v370 = vpop.f32.mrf.mxu0
    %v371 = vadd.f32 %v192, %v370
    %372 = vmatmul.bf16.gmra.mxu0 %v155
    %v373 = vpop.f32.mrf.mxu0
    %v374 = vadd.f32 %v192, %v373
    %v375 = vpop.f32.mrf.mxu0
    %v376 = vadd.f32 %v192, %v375
    %377 = vmatmul.bf16.gmra.mxu0 %v156
    %v378 = vpop.f32.mrf.mxu0
    %v379 = vadd.f32 %v192, %v378
    %v380 = vpop.f32.mrf.mxu0
    %v381 = vadd.f32 %v192, %v380
    %382 = vdwg.mxu0
    %383 = vmatpush.bf16.msra.mxu0 %v300
    %384 = vmatpush.bf16.msra.mxu0 %v297
    %385 = vmatpush.bf16.msra.mxu0 %v294
    %386 = vmatpush.bf16.msra.mxu0 %v291
    %387 = vmatpush.bf16.msra.mxu0 %v288
    %388 = vmatpush.bf16.msra.mxu0 %v285
    %389 = vmatpush.bf16.msra.mxu0 %v282
    %390 = vmatpush.bf16.msra.mxu0 %v279
    %391 = vmatmul.bf16.gmra.mxu0 %v153
    %v392 = vpop.f32.mrf.mxu0
    %v393 = vadd.f32 %v193, %v392
    %v394 = vpop.f32.mrf.mxu0
    %v395 = vadd.f32 %v193, %v394
    %396 = vmatmul.bf16.gmra.mxu0 %v154
    %v397 = vpop.f32.mrf.mxu0
    %v398 = vadd.f32 %v193, %v397
    %v399 = vpop.f32.mrf.mxu0
    %v400 = vadd.f32 %v193, %v399
    %401 = vmatmul.bf16.gmra.mxu0 %v155
    %v402 = vpop.f32.mrf.mxu0
    %v403 = vadd.f32 %v193, %v402
    %v404 = vpop.f32.mrf.mxu0
    %v405 = vadd.f32 %v193, %v404
    %406 = vmatmul.bf16.gmra.mxu0 %v156
    %v407 = vpop.f32.mrf.mxu0
    %v408 = vadd.f32 %v193, %v407
    %v409 = vpop.f32.mrf.mxu0
    %v410 = vadd.f32 %v193, %v409
    %411 = vdwg.mxu0
    %412 = vst [vmem:[#allocation4] sm:$0xff] %v335
    %413 = vst [vmem:[#allocation4 + $0x8] sm:$0xff] %v364
    %414 = vst [vmem:[#allocation4 + $0x10] sm:$0xff] %v393
    %415 = vst [vmem:[#allocation4 + $0x18] sm:$0xff] %v337
    %416 = vst [vmem:[#allocation4 + $0x20] sm:$0xff] %v366
    %417 = vst [vmem:[#allocation4 + $0x28] sm:$0xff] %v395
    %418 = vst [vmem:[#allocation4 + $0x30] sm:$0xff] %v340
    %419 = vst [vmem:[#allocation4 + $0x38] sm:$0xff] %v369
    %420 = vst [vmem:[#allocation4 + $0x40] sm:$0xff] %v398
    %421 = vst [vmem:[#allocation4 + $0x48] sm:$0xff] %v342
    %422 = vst [vmem:[#allocation4 + $0x50] sm:$0xff] %v371
    %423 = vst [vmem:[#allocation4 + $0x58] sm:$0xff] %v400
    %424 = vst [vmem:[#allocation4 + $0x60] sm:$0xff] %v345
    %425 = vst [vmem:[#allocation4 + $0x68] sm:$0xff] %v374
    %426 = vst [vmem:[#allocation4 + $0x70] sm:$0xff] %v403
    %427 = vst [vmem:[#allocation4 + $0x78] sm:$0xff] %v347
    %428 = vst [vmem:[#allocation4 + $0x80] sm:$0xff] %v376
    %429 = vst [vmem:[#allocation4 + $0x88] sm:$0xff] %v405
    %430 = vst [vmem:[#allocation4 + $0x90] sm:$0xff] %v350
    %431 = vst [vmem:[#allocation4 + $0x98] sm:$0xff] %v379
    %432 = vst [vmem:[#allocation4 + $0xa0] sm:$0xff] %v408
    %433 = vst [vmem:[#allocation4 + $0xa8] sm:$0xff] %v352
    %434 = vst [vmem:[#allocation4 + $0xb0] sm:$0xff] %v381
    %435 = vst [vmem:[#allocation4 + $0xb8] sm:$0xff] %v410
    %v436 = vld [vmem:[#allocation13] sm:$0xff]
    %v437 = vld [vmem:[#allocation13 + $0x8] sm:$0xf]
    %v438 = vld [vmem:[#allocation13 + $0xc] sm:$0xff]
    %v439 = vld [vmem:[#allocation13 + $0x14] sm:$0xf]
    %v440 = vld [vmem:[#allocation13 + $0x18] sm:$0xff]
    %v441 = vld [vmem:[#allocation13 + $0x20] sm:$0xf]
    %v442 = vld [vmem:[#allocation13 + $0x24] sm:$0xff]
    %v443 = vld [vmem:[#allocation13 + $0x2c] sm:$0xf]
    %v444 = vld [vmem:[#allocation13 + $0x30] sm:$0xff]
    %v445 = vld [vmem:[#allocation13 + $0x38] sm:$0xf]
    %v446 = vld [vmem:[#allocation13 + $0x3c] sm:$0xff]
    %v447 = vld [vmem:[#allocation13 + $0x44] sm:$0xf]
    %v448 = vld [vmem:[#allocation13 + $0x48] sm:$0xff]
    %v449 = vld [vmem:[#allocation13 + $0x50] sm:$0xf]
    %v450 = vld [vmem:[#allocation13 + $0x54] sm:$0xff]
    %v451 = vld [vmem:[#allocation13 + $0x5c] sm:$0xf]
    %v452 = vld [vmem:[#allocation13 + $0x60] sm:$0xff]
    %v453 = vld [vmem:[#allocation13 + $0x68] sm:$0xf]
    %v454 = vld [vmem:[#allocation13 + $0x6c] sm:$0xff]
    %v455 = vld [vmem:[#allocation13 + $0x74] sm:$0xf]
    %v456 = vld [vmem:[#allocation13 + $0x78] sm:$0xff]
    %v457 = vld [vmem:[#allocation13 + $0x80] sm:$0xf]
    %v458 = vld [vmem:[#allocation13 + $0x84] sm:$0xff]
    %v459 = vld [vmem:[#allocation13 + $0x8c] sm:$0xf]
    %v460 = vld [vmem:[#allocation13 + $0x90] sm:$0xff]
    %v461 = vld [vmem:[#allocation13 + $0x98] sm:$0xf]
    %v462 = vld [vmem:[#allocation13 + $0x9c] sm:$0xff]
    %v463 = vld [vmem:[#allocation13 + $0xa4] sm:$0xf]
    %v464 = vld [vmem:[#allocation13 + $0xa8] sm:$0xff]
    %v465 = vld [vmem:[#allocation13 + $0xb0] sm:$0xf]
    %v466 = vld [vmem:[#allocation13 + $0xb4] sm:$0xff]
    %v467 = vld [vmem:[#allocation13 + $0xbc] sm:$0xf]
    %v468 = vld [vmem:[%s6] sm:$0x1]
    %s469 = smul.u32 0, 3
    %s470 = smul.addr %s469, 8
    %s471 = scalar_lea.vmem [#allocation4], %s470
    %v472 = vld [vmem:[%s471] sm:$0xff]
    %v473 = vld [vmem:[%s471 + $0x8] sm:$0xff]
    %v474 = vld [vmem:[%s471 + $0x10] sm:$0xff]
    %v507 = vunpack.c.l.b16 %v436
    %v508 = vunpack.c.h.b16 %v436
    %v509 = vunpack.c.l.b16 %v437
    %v510 = vunpack.c.l.b16 %v438
    %v511 = vunpack.c.h.b16 %v438
    %v512 = vunpack.c.l.b16 %v439
    %v513 = vunpack.c.l.b16 %v440
    %v514 = vunpack.c.h.b16 %v440
    %v515 = vunpack.c.l.b16 %v441
    %v516 = vunpack.c.l.b16 %v442
    %v517 = vunpack.c.h.b16 %v442
    %v518 = vunpack.c.l.b16 %v443
    %v519 = vunpack.c.l.b16 %v444
    %v520 = vunpack.c.h.b16 %v444
    %v521 = vunpack.c.l.b16 %v445
    %v522 = vunpack.c.l.b16 %v446
    %v523 = vunpack.c.h.b16 %v446
    %v524 = vunpack.c.l.b16 %v447
    %v525 = vunpack.c.l.b16 %v448
    %v526 = vunpack.c.h.b16 %v448
    %v527 = vunpack.c.l.b16 %v449
    %v528 = vunpack.c.l.b16 %v450
    %v529 = vunpack.c.h.b16 %v450
    %v530 = vunpack.c.l.b16 %v451
    %v531 = vunpack.c.l.b16 %v452
    %v532 = vunpack.c.h.b16 %v452
    %v533 = vunpack.c.l.b16 %v453
    %v534 = vunpack.c.l.b16 %v454
    %v535 = vunpack.c.h.b16 %v454
    %v536 = vunpack.c.l.b16 %v455
    %v537 = vunpack.c.l.b16 %v456
    %v538 = vunpack.c.h.b16 %v456
    %v539 = vunpack.c.l.b16 %v457
    %v540 = vunpack.c.l.b16 %v458
    %v541 = vunpack.c.h.b16 %v458
    %v542 = vunpack.c.l.b16 %v459
    %v543 = vunpack.c.l.b16 %v460
    %v544 = vunpack.c.h.b16 %v460
    %v545 = vunpack.c.l.b16 %v461
    %v546 = vunpack.c.l.b16 %v462
    %v547 = vunpack.c.h.b16 %v462
    %v548 = vunpack.c.l.b16 %v463
    %v549 = vunpack.c.l.b16 %v464
    %v550 = vunpack.c.h.b16 %v464
    %v551 = vunpack.c.l.b16 %v465
    %v552 = vunpack.c.l.b16 %v466
    %v553 = vunpack.c.h.b16 %v466
    %v554 = vunpack.c.l.b16 %v467
    %v555 = vpack.c.b16 %v510, %v507
    %v556 = vpack.c.b16 %v511, %v508
    %v557 = vpack.c.b16 %v512, %v509
    %v558 = vpack.c.b16 %v516, %v513
    %v559 = vpack.c.b16 %v517, %v514
    %v560 = vpack.c.b16 %v518, %v515
    %v561 = vpack.c.b16 %v522, %v519
    %v562 = vpack.c.b16 %v523, %v520
    %v563 = vpack.c.b16 %v524, %v521
    %v564 = vpack.c.b16 %v528, %v525
    %v565 = vpack.c.b16 %v529, %v526
    %v566 = vpack.c.b16 %v530, %v527
    %v567 = vpack.c.b16 %v534, %v531
    %v568 = vpack.c.b16 %v535, %v532
    %v569 = vpack.c.b16 %v536, %v533
    %v570 = vpack.c.b16 %v540, %v537
    %v571 = vpack.c.b16 %v541, %v538
    %v572 = vpack.c.b16 %v542, %v539
    %v573 = vpack.c.b16 %v546, %v543
    %v574 = vpack.c.b16 %v547, %v544
    %v575 = vpack.c.b16 %v548, %v545
    %v576 = vpack.c.b16 %v552, %v549
    %v577 = vpack.c.b16 %v553, %v550
    %v578 = vpack.c.b16 %v554, %v551
    %603 = vmatpush.bf16.msra.mxu0 %v576
    %604 = vmatpush.bf16.msra.mxu0 %v573
    %605 = vmatpush.bf16.msra.mxu0 %v570
    %606 = vmatpush.bf16.msra.mxu0 %v567
    %607 = vmatpush.bf16.msra.mxu0 %v564
    %608 = vmatpush.bf16.msra.mxu0 %v561
    %609 = vmatpush.bf16.msra.mxu0 %v558
    %610 = vmatpush.bf16.msra.mxu0 %v555
    %611 = vmatmul.bf16.gmra.mxu0 0
    %v612 = vpop.f32.mrf.mxu0
    %v613 = vadd.f32 0.0, %v612
    %v614 = vpop.f32.mrf.mxu0
    %615 = vdwg.mxu0
    %616 = vmatpush.bf16.msra.mxu0 %v577
    %617 = vmatpush.bf16.msra.mxu0 %v574
    %618 = vmatpush.bf16.msra.mxu0 %v571
    %619 = vmatpush.bf16.msra.mxu0 %v568
    %620 = vmatpush.bf16.msra.mxu0 %v565
    %621 = vmatpush.bf16.msra.mxu0 %v562
    %622 = vmatpush.bf16.msra.mxu0 %v559
    %623 = vmatpush.bf16.msra.mxu0 %v556
    %624 = vmatmul.bf16.gmra.mxu0 0
    %v625 = vpop.f32.mrf.mxu0
    %v626 = vadd.f32 0.0, %v625
    %v627 = vpop.f32.mrf.mxu0
    %628 = vdwg.mxu0
    %629 = vmatpush.bf16.msra.mxu0 %v578
    %630 = vmatpush.bf16.msra.mxu0 %v575
    %631 = vmatpush.bf16.msra.mxu0 %v572
    %632 = vmatpush.bf16.msra.mxu0 %v569
    %633 = vmatpush.bf16.msra.mxu0 %v566
    %634 = vmatpush.bf16.msra.mxu0 %v563
    %635 = vmatpush.bf16.msra.mxu0 %v560
    %636 = vmatpush.bf16.msra.mxu0 %v557
    %637 = vmatmul.bf16.gmra.mxu0 0
    %v638 = vpop.f32.mrf.mxu0
    %v639 = vadd.f32 0.0, %v638
    %v640 = vpop.f32.mrf.mxu0
    %641 = vdwg.mxu0
    %v642 = vadd.f32 %v472, %v613
    %v643 = vxor.u32 %v642, 2147483648
    %v644 = vmul.f32 %v643, 1.442695
    %v645 = vpow.pop %v644
    %v646 = vadd.f32 %v645, 1.0
    %v647 = vrcp.pop %v646
    %v648 = vmul.f32 %v646, %v647
    %v649 = vsub.f32 1.0, %v648
    %v650 = vmul.f32 %v647, %v649
    %v651 = vadd.f32 %v647, %v650
    %vm652 = vweird.f32 %v646
    %vm653 = vweird.f32 %v647
    %vm654 = vmor %vm652, %vm653
    %v655 = vsel %vm654, %v647, %v651
    %v656 = vand.u32 2147483647, %v646
    %vm657 = vcmp.eq.f32.partialorder %v656, 8.507059e+37
    %v658 = vand.u32 %v646, 2147483648
    %v659 = vor.u32 1.1754944e-38, %v658
    %v660 = vsel %vm657, %v659, %v655
    %v661 = vmul.f32 1.0, %v660
    %v662 = vadd.f32 %v473, %v626
    %v663 = vxor.u32 %v662, 2147483648
    %v664 = vmul.f32 %v663, 1.442695
    %v665 = vpow.pop %v664
    %v666 = vadd.f32 %v665, 1.0
    %v667 = vrcp.pop %v666
    %v668 = vmul.f32 %v666, %v667
    %v669 = vsub.f32 1.0, %v668
    %v670 = vmul.f32 %v667, %v669
    %v671 = vadd.f32 %v667, %v670
    %vm672 = vweird.f32 %v666
    %vm673 = vweird.f32 %v667
    %vm674 = vmor %vm672, %vm673
    %v675 = vsel %vm674, %v667, %v671
    %v676 = vand.u32 2147483647, %v666
    %vm677 = vcmp.eq.f32.partialorder %v676, 8.507059e+37
    %v678 = vand.u32 %v666, 2147483648
    %v679 = vor.u32 1.1754944e-38, %v678
    %v680 = vsel %vm677, %v679, %v675
    %v681 = vmul.f32 1.0, %v680
    %v683 = vperm.slane %v468, 0
    %v685 = vadd.f32 %v639, %v683
    %v686 = vmul.f32 %v661, %v685
    %v687 = vadd.f32 %v474, %v686
    %v688 = vtanh.pop %v687
    %v689 = vsub.f32 1.0, %v681
    %v690 = vmul.f32 %v689, %v688
    %v691 = vmul.f32 %v681, 0.0
    %v692 = vadd.f32 %v690, %v691
    %s693 = smul.u32 1, 3
    %s694 = smul.addr %s693, 8
    %s695 = scalar_lea.vmem [#allocation4], %s694
    %v696 = vld [vmem:[%s695] sm:$0xff]
    %v697 = vld [vmem:[%s695 + $0x8] sm:$0xff]
    %v698 = vld [vmem:[%s695 + $0x10] sm:$0xff]
    %v699 = vpack.c.bf16 %v692, %v692
    %700 = vmatpush.bf16.msra.mxu0 %v576
    %701 = vmatpush.bf16.msra.mxu0 %v573
    %702 = vmatpush.bf16.msra.mxu0 %v570
    %703 = vmatpush.bf16.msra.mxu0 %v567
    %704 = vmatpush.bf16.msra.mxu0 %v564
    %705 = vmatpush.bf16.msra.mxu0 %v561
    %706 = vmatpush.bf16.msra.mxu0 %v558
    %707 = vmatpush.bf16.msra.mxu0 %v555
    %708 = vmatmul.bf16.gmra.mxu0 %v699
    %v709 = vpop.f32.mrf.mxu0
    %v710 = vadd.f32 0.0, %v709
    %v711 = vpop.f32.mrf.mxu0
    %712 = vdwg.mxu0
    %713 = vmatpush.bf16.msra.mxu0 %v577
    %714 = vmatpush.bf16.msra.mxu0 %v574
    %715 = vmatpush.bf16.msra.mxu0 %v571
    %716 = vmatpush.bf16.msra.mxu0 %v568
    %717 = vmatpush.bf16.msra.mxu0 %v565
    %718 = vmatpush.bf16.msra.mxu0 %v562
    %719 = vmatpush.bf16.msra.mxu0 %v559
    %720 = vmatpush.bf16.msra.mxu0 %v556
    %721 = vmatmul.bf16.gmra.mxu0 %v699
    %v722 = vpop.f32.mrf.mxu0
    %v723 = vadd.f32 0.0, %v722
    %v724 = vpop.f32.mrf.mxu0
    %725 = vdwg.mxu0
    %726 = vmatpush.bf16.msra.mxu0 %v578
    %727 = vmatpush.bf16.msra.mxu0 %v575
    %728 = vmatpush.bf16.msra.mxu0 %v572
    %729 = vmatpush.bf16.msra.mxu0 %v569
    %730 = vmatpush.bf16.msra.mxu0 %v566
    %731 = vmatpush.bf16.msra.mxu0 %v563
    %732 = vmatpush.bf16.msra.mxu0 %v560
    %733 = vmatpush.bf16.msra.mxu0 %v557
    %734 = vmatmul.bf16.gmra.mxu0 %v699
    %v735 = vpop.f32.mrf.mxu0
    %v736 = vadd.f32 0.0, %v735
    %v737 = vpop.f32.mrf.mxu0
    %738 = vdwg.mxu0
    %v739 = vadd.f32 %v696, %v710
    %v740 = vxor.u32 %v739, 2147483648
    %v741 = vmul.f32 %v740, 1.442695
    %v742 = vpow.pop %v741
    %v743 = vadd.f32 %v742, 1.0
    %v744 = vrcp.pop %v743
    %v745 = vmul.f32 %v743, %v744
    %v746 = vsub.f32 1.0, %v745
    %v747 = vmul.f32 %v744, %v746
    %v748 = vadd.f32 %v744, %v747
    %vm749 = vweird.f32 %v743
    %vm750 = vweird.f32 %v744
    %vm751 = vmor %vm749, %vm750
    %v752 = vsel %vm751, %v744, %v748
    %v753 = vand.u32 2147483647, %v743
    %vm754 = vcmp.eq.f32.partialorder %v753, 8.507059e+37
    %v755 = vand.u32 %v743, 2147483648
    %v756 = vor.u32 1.1754944e-38, %v755
    %v757 = vsel %vm754, %v756, %v752
    %v758 = vmul.f32 1.0, %v757
    %v759 = vadd.f32 %v697, %v723
    %v760 = vxor.u32 %v759, 2147483648
    %v761 = vmul.f32 %v760, 1.442695
    %v762 = vpow.pop %v761
    %v763 = vadd.f32 %v762, 1.0
    %v764 = vrcp.pop %v763
    %v765 = vmul.f32 %v763, %v764
    %v766 = vsub.f32 1.0, %v765
    %v767 = vmul.f32 %v764, %v766
    %v768 = vadd.f32 %v764, %v767
    %vm769 = vweird.f32 %v763
    %vm770 = vweird.f32 %v764
    %vm771 = vmor %vm769, %vm770
    %v772 = vsel %vm771, %v764, %v768
    %v773 = vand.u32 2147483647, %v763
    %vm774 = vcmp.eq.f32.partialorder %v773, 8.507059e+37
    %v775 = vand.u32 %v763, 2147483648
    %v776 = vor.u32 1.1754944e-38, %v775
    %v777 = vsel %vm774, %v776, %v772
    %v778 = vmul.f32 1.0, %v777
    %v779 = vadd.f32 %v736, %v683
    %v780 = vmul.f32 %v758, %v779
    %v781 = vadd.f32 %v698, %v780
    %v782 = vtanh.pop %v781
    %v783 = vsub.f32 1.0, %v778
    %v784 = vmul.f32 %v783, %v782
    %v785 = vmul.f32 %v778, %v692
    %v786 = vadd.f32 %v784, %v785
    %s787 = smul.u32 2, 3
    %s788 = smul.addr %s787, 8
    %s789 = scalar_lea.vmem [#allocation4], %s788
    %v790 = vld [vmem:[%s789] sm:$0xff]
    %v791 = vld [vmem:[%s789 + $0x8] sm:$0xff]
    %v792 = vld [vmem:[%s789 + $0x10] sm:$0xff]
    %v793 = vpack.c.bf16 %v786, %v786
    %794 = vmatpush.bf16.msra.mxu0 %v576
    %795 = vmatpush.bf16.msra.mxu0 %v573
    %796 = vmatpush.bf16.msra.mxu0 %v570
    %797 = vmatpush.bf16.msra.mxu0 %v567
    %798 = vmatpush.bf16.msra.mxu0 %v564
    %799 = vmatpush.bf16.msra.mxu0 %v561
    %800 = vmatpush.bf16.msra.mxu0 %v558
    %801 = vmatpush.bf16.msra.mxu0 %v555
    %802 = vmatmul.bf16.gmra.mxu0 %v793
    %v803 = vpop.f32.mrf.mxu0
    %v804 = vadd.f32 0.0, %v803
    %v805 = vpop.f32.mrf.mxu0
    %806 = vdwg.mxu0
    %807 = vmatpush.bf16.msra.mxu0 %v577
    %808 = vmatpush.bf16.msra.mxu0 %v574
    %809 = vmatpush.bf16.msra.mxu0 %v571
    %810 = vmatpush.bf16.msra.mxu0 %v568
    %811 = vmatpush.bf16.msra.mxu0 %v565
    %812 = vmatpush.bf16.msra.mxu0 %v562
    %813 = vmatpush.bf16.msra.mxu0 %v559
    %814 = vmatpush.bf16.msra.mxu0 %v556
    %815 = vmatmul.bf16.gmra.mxu0 %v793
    %v816 = vpop.f32.mrf.mxu0
    %v817 = vadd.f32 0.0, %v816
    %v818 = vpop.f32.mrf.mxu0
    %819 = vdwg.mxu0
    %820 = vmatpush.bf16.msra.mxu0 %v578
    %821 = vmatpush.bf16.msra.mxu0 %v575
    %822 = vmatpush.bf16.msra.mxu0 %v572
    %823 = vmatpush.bf16.msra.mxu0 %v569
    %824 = vmatpush.bf16.msra.mxu0 %v566
    %825 = vmatpush.bf16.msra.mxu0 %v563
    %826 = vmatpush.bf16.msra.mxu0 %v560
    %827 = vmatpush.bf16.msra.mxu0 %v557
    %828 = vmatmul.bf16.gmra.mxu0 %v793
    %v829 = vpop.f32.mrf.mxu0
    %v830 = vadd.f32 0.0, %v829
    %v831 = vpop.f32.mrf.mxu0
    %832 = vdwg.mxu0
    %v833 = vadd.f32 %v790, %v804
    %v834 = vxor.u32 %v833, 2147483648
    %v835 = vmul.f32 %v834, 1.442695
    %v836 = vpow.pop %v835
    %v837 = vadd.f32 %v836, 1.0
    %v838 = vrcp.pop %v837
    %v839 = vmul.f32 %v837, %v838
    %v840 = vsub.f32 1.0, %v839
    %v841 = vmul.f32 %v838, %v840
    %v842 = vadd.f32 %v838, %v841
    %vm843 = vweird.f32 %v837
    %vm844 = vweird.f32 %v838
    %vm845 = vmor %vm843, %vm844
    %v846 = vsel %vm845, %v838, %v842
    %v847 = vand.u32 2147483647, %v837
    %vm848 = vcmp.eq.f32.partialorder %v847, 8.507059e+37
    %v849 = vand.u32 %v837, 2147483648
    %v850 = vor.u32 1.1754944e-38, %v849
    %v851 = vsel %vm848, %v850, %v846
    %v852 = vmul.f32 1.0, %v851
    %v853 = vadd.f32 %v791, %v817
    %v854 = vxor.u32 %v853, 2147483648
    %v855 = vmul.f32 %v854, 1.442695
    %v856 = vpow.pop %v855
    %v857 = vadd.f32 %v856, 1.0
    %v858 = vrcp.pop %v857
    %v859 = vmul.f32 %v857, %v858
    %v860 = vsub.f32 1.0, %v859
    %v861 = vmul.f32 %v858, %v860
    %v862 = vadd.f32 %v858, %v861
    %vm863 = vweird.f32 %v857
    %vm864 = vweird.f32 %v858
    %vm865 = vmor %vm863, %vm864
    %v866 = vsel %vm865, %v858, %v862
    %v867 = vand.u32 2147483647, %v857
    %vm868 = vcmp.eq.f32.partialorder %v867, 8.507059e+37
    %v869 = vand.u32 %v857, 2147483648
    %v870 = vor.u32 1.1754944e-38, %v869
    %v871 = vsel %vm868, %v870, %v866
    %v872 = vmul.f32 1.0, %v871
    %v873 = vadd.f32 %v830, %v683
    %v874 = vmul.f32 %v852, %v873
    %v875 = vadd.f32 %v792, %v874
    %v876 = vtanh.pop %v875
    %v877 = vsub.f32 1.0, %v872
    %v878 = vmul.f32 %v877, %v876
    %v879 = vmul.f32 %v872, %v786
    %v880 = vadd.f32 %v878, %v879
    %s881 = smul.u32 3, 3
    %s882 = smul.addr %s881, 8
    %s883 = scalar_lea.vmem [#allocation4], %s882
    %v884 = vld [vmem:[%s883] sm:$0xff]
    %v885 = vld [vmem:[%s883 + $0x8] sm:$0xff]
    %v886 = vld [vmem:[%s883 + $0x10] sm:$0xff]
    %v887 = vpack.c.bf16 %v880, %v880
    %888 = vmatpush.bf16.msra.mxu0 %v576
    %889 = vmatpush.bf16.msra.mxu0 %v573
    %890 = vmatpush.bf16.msra.mxu0 %v570
    %891 = vmatpush.bf16.msra.mxu0 %v567
    %892 = vmatpush.bf16.msra.mxu0 %v564
    %893 = vmatpush.bf16.msra.mxu0 %v561
    %894 = vmatpush.bf16.msra.mxu0 %v558
    %895 = vmatpush.bf16.msra.mxu0 %v555
    %896 = vmatmul.bf16.gmra.mxu0 %v887
    %v897 = vpop.f32.mrf.mxu0
    %v898 = vadd.f32 0.0, %v897
    %v899 = vpop.f32.mrf.mxu0
    %900 = vdwg.mxu0
    %901 = vmatpush.bf16.msra.mxu0 %v577
    %902 = vmatpush.bf16.msra.mxu0 %v574
    %903 = vmatpush.bf16.msra.mxu0 %v571
    %904 = vmatpush.bf16.msra.mxu0 %v568
    %905 = vmatpush.bf16.msra.mxu0 %v565
    %906 = vmatpush.bf16.msra.mxu0 %v562
    %907 = vmatpush.bf16.msra.mxu0 %v559
    %908 = vmatpush.bf16.msra.mxu0 %v556
    %909 = vmatmul.bf16.gmra.mxu0 %v887
    %v910 = vpop.f32.mrf.mxu0
    %v911 = vadd.f32 0.0, %v910
    %v912 = vpop.f32.mrf.mxu0
    %913 = vdwg.mxu0
    %914 = vmatpush.bf16.msra.mxu0 %v578
    %915 = vmatpush.bf16.msra.mxu0 %v575
    %916 = vmatpush.bf16.msra.mxu0 %v572
    %917 = vmatpush.bf16.msra.mxu0 %v569
    %918 = vmatpush.bf16.msra.mxu0 %v566
    %919 = vmatpush.bf16.msra.mxu0 %v563
    %920 = vmatpush.bf16.msra.mxu0 %v560
    %921 = vmatpush.bf16.msra.mxu0 %v557
    %922 = vmatmul.bf16.gmra.mxu0 %v887
    %v923 = vpop.f32.mrf.mxu0
    %v924 = vadd.f32 0.0, %v923
    %v925 = vpop.f32.mrf.mxu0
    %926 = vdwg.mxu0
    %v927 = vadd.f32 %v884, %v898
    %v928 = vxor.u32 %v927, 2147483648
    %v929 = vmul.f32 %v928, 1.442695
    %v930 = vpow.pop %v929
    %v931 = vadd.f32 %v930, 1.0
    %v932 = vrcp.pop %v931
    %v933 = vmul.f32 %v931, %v932
    %v934 = vsub.f32 1.0, %v933
    %v935 = vmul.f32 %v932, %v934
    %v936 = vadd.f32 %v932, %v935
    %vm937 = vweird.f32 %v931
    %vm938 = vweird.f32 %v932
    %vm939 = vmor %vm937, %vm938
    %v940 = vsel %vm939, %v932, %v936
    %v941 = vand.u32 2147483647, %v931
    %vm942 = vcmp.eq.f32.partialorder %v941, 8.507059e+37
    %v943 = vand.u32 %v931, 2147483648
    %v944 = vor.u32 1.1754944e-38, %v943
    %v945 = vsel %vm942, %v944, %v940
    %v946 = vmul.f32 1.0, %v945
    %v947 = vadd.f32 %v885, %v911
    %v948 = vxor.u32 %v947, 2147483648
    %v949 = vmul.f32 %v948, 1.442695
    %v950 = vpow.pop %v949
    %v951 = vadd.f32 %v950, 1.0
    %v952 = vrcp.pop %v951
    %v953 = vmul.f32 %v951, %v952
    %v954 = vsub.f32 1.0, %v953
    %v955 = vmul.f32 %v952, %v954
    %v956 = vadd.f32 %v952, %v955
    %vm957 = vweird.f32 %v951
    %vm958 = vweird.f32 %v952
    %vm959 = vmor %vm957, %vm958
    %v960 = vsel %vm959, %v952, %v956
    %v961 = vand.u32 2147483647, %v951
    %vm962 = vcmp.eq.f32.partialorder %v961, 8.507059e+37
    %v963 = vand.u32 %v951, 2147483648
    %v964 = vor.u32 1.1754944e-38, %v963
    %v965 = vsel %vm962, %v964, %v960
    %v966 = vmul.f32 1.0, %v965
    %v967 = vadd.f32 %v924, %v683
    %v968 = vmul.f32 %v946, %v967
    %v969 = vadd.f32 %v886, %v968
    %v970 = vtanh.pop %v969
    %v971 = vsub.f32 1.0, %v966
    %v972 = vmul.f32 %v971, %v970
    %v973 = vmul.f32 %v966, %v880
    %v974 = vadd.f32 %v972, %v973
    %s975 = smul.u32 4, 3
    %s976 = smul.addr %s975, 8
    %s977 = scalar_lea.vmem [#allocation4], %s976
    %v978 = vld [vmem:[%s977] sm:$0xff]
    %v979 = vld [vmem:[%s977 + $0x8] sm:$0xff]
    %v980 = vld [vmem:[%s977 + $0x10] sm:$0xff]
    %v981 = vpack.c.bf16 %v974, %v974
    %982 = vmatpush.bf16.msra.mxu0 %v576
    %983 = vmatpush.bf16.msra.mxu0 %v573
    %984 = vmatpush.bf16.msra.mxu0 %v570
    %985 = vmatpush.bf16.msra.mxu0 %v567
    %986 = vmatpush.bf16.msra.mxu0 %v564
    %987 = vmatpush.bf16.msra.mxu0 %v561
    %988 = vmatpush.bf16.msra.mxu0 %v558
    %989 = vmatpush.bf16.msra.mxu0 %v555
    %990 = vmatmul.bf16.gmra.mxu0 %v981
    %v991 = vpop.f32.mrf.mxu0
    %v992 = vadd.f32 0.0, %v991
    %v993 = vpop.f32.mrf.mxu0
    %994 = vdwg.mxu0
    %995 = vmatpush.bf16.msra.mxu0 %v577
    %996 = vmatpush.bf16.msra.mxu0 %v574
    %997 = vmatpush.bf16.msra.mxu0 %v571
    %998 = vmatpush.bf16.msra.mxu0 %v568
    %999 = vmatpush.bf16.msra.mxu0 %v565
    %1000 = vmatpush.bf16.msra.mxu0 %v562
    %1001 = vmatpush.bf16.msra.mxu0 %v559
    %1002 = vmatpush.bf16.msra.mxu0 %v556
    %1003 = vmatmul.bf16.gmra.mxu0 %v981
    %v1004 = vpop.f32.mrf.mxu0
    %v1005 = vadd.f32 0.0, %v1004
    %v1006 = vpop.f32.mrf.mxu0
    %1007 = vdwg.mxu0
    %1008 = vmatpush.bf16.msra.mxu0 %v578
    %1009 = vmatpush.bf16.msra.mxu0 %v575
    %1010 = vmatpush.bf16.msra.mxu0 %v572
    %1011 = vmatpush.bf16.msra.mxu0 %v569
    %1012 = vmatpush.bf16.msra.mxu0 %v566
    %1013 = vmatpush.bf16.msra.mxu0 %v563
    %1014 = vmatpush.bf16.msra.mxu0 %v560
    %1015 = vmatpush.bf16.msra.mxu0 %v557
    %1016 = vmatmul.bf16.gmra.mxu0 %v981
    %v1017 = vpop.f32.mrf.mxu0
    %v1018 = vadd.f32 0.0, %v1017
    %v1019 = vpop.f32.mrf.mxu0
    %1020 = vdwg.mxu0
    %v1021 = vadd.f32 %v978, %v992
    %v1022 = vxor.u32 %v1021, 2147483648
    %v1023 = vmul.f32 %v1022, 1.442695
    %v1024 = vpow.pop %v1023
    %v1025 = vadd.f32 %v1024, 1.0
    %v1026 = vrcp.pop %v1025
    %v1027 = vmul.f32 %v1025, %v1026
    %v1028 = vsub.f32 1.0, %v1027
    %v1029 = vmul.f32 %v1026, %v1028
    %v1030 = vadd.f32 %v1026, %v1029
    %vm1031 = vweird.f32 %v1025
    %vm1032 = vweird.f32 %v1026
    %vm1033 = vmor %vm1031, %vm1032
    %v1034 = vsel %vm1033, %v1026, %v1030
    %v1035 = vand.u32 2147483647, %v1025
    %vm1036 = vcmp.eq.f32.partialorder %v1035, 8.507059e+37
    %v1037 = vand.u32 %v1025, 2147483648
    %v1038 = vor.u32 1.1754944e-38, %v1037
    %v1039 = vsel %vm1036, %v1038, %v1034
    %v1040 = vmul.f32 1.0, %v1039
    %v1041 = vadd.f32 %v979, %v1005
    %v1042 = vxor.u32 %v1041, 2147483648
    %v1043 = vmul.f32 %v1042, 1.442695
    %v1044 = vpow.pop %v1043
    %v1045 = vadd.f32 %v1044, 1.0
    %v1046 = vrcp.pop %v1045
    %v1047 = vmul.f32 %v1045, %v1046
    %v1048 = vsub.f32 1.0, %v1047
    %v1049 = vmul.f32 %v1046, %v1048
    %v1050 = vadd.f32 %v1046, %v1049
    %vm1051 = vweird.f32 %v1045
    %vm1052 = vweird.f32 %v1046
    %vm1053 = vmor %vm1051, %vm1052
    %v1054 = vsel %vm1053, %v1046, %v1050
    %v1055 = vand.u32 2147483647, %v1045
    %vm1056 = vcmp.eq.f32.partialorder %v1055, 8.507059e+37
    %v1057 = vand.u32 %v1045, 2147483648
    %v1058 = vor.u32 1.1754944e-38, %v1057
    %v1059 = vsel %vm1056, %v1058, %v1054
    %v1060 = vmul.f32 1.0, %v1059
    %v1061 = vadd.f32 %v1018, %v683
    %v1062 = vmul.f32 %v1040, %v1061
    %v1063 = vadd.f32 %v980, %v1062
    %v1064 = vtanh.pop %v1063
    %v1065 = vsub.f32 1.0, %v1060
    %v1066 = vmul.f32 %v1065, %v1064
    %v1067 = vmul.f32 %v1060, %v974
    %v1068 = vadd.f32 %v1066, %v1067
    %s1069 = smul.u32 5, 3
    %s1070 = smul.addr %s1069, 8
    %s1071 = scalar_lea.vmem [#allocation4], %s1070
    %v1072 = vld [vmem:[%s1071] sm:$0xff]
    %v1073 = vld [vmem:[%s1071 + $0x8] sm:$0xff]
    %v1074 = vld [vmem:[%s1071 + $0x10] sm:$0xff]
    %v1075 = vpack.c.bf16 %v1068, %v1068
    %1076 = vmatpush.bf16.msra.mxu0 %v576
    %1077 = vmatpush.bf16.msra.mxu0 %v573
    %1078 = vmatpush.bf16.msra.mxu0 %v570
    %1079 = vmatpush.bf16.msra.mxu0 %v567
    %1080 = vmatpush.bf16.msra.mxu0 %v564
    %1081 = vmatpush.bf16.msra.mxu0 %v561
    %1082 = vmatpush.bf16.msra.mxu0 %v558
    %1083 = vmatpush.bf16.msra.mxu0 %v555
    %1084 = vmatmul.bf16.gmra.mxu0 %v1075
    %v1085 = vpop.f32.mrf.mxu0
    %v1086 = vadd.f32 0.0, %v1085
    %v1087 = vpop.f32.mrf.mxu0
    %1088 = vdwg.mxu0
    %1089 = vmatpush.bf16.msra.mxu0 %v577
    %1090 = vmatpush.bf16.msra.mxu0 %v574
    %1091 = vmatpush.bf16.msra.mxu0 %v571
    %1092 = vmatpush.bf16.msra.mxu0 %v568
    %1093 = vmatpush.bf16.msra.mxu0 %v565
    %1094 = vmatpush.bf16.msra.mxu0 %v562
    %1095 = vmatpush.bf16.msra.mxu0 %v559
    %1096 = vmatpush.bf16.msra.mxu0 %v556
    %1097 = vmatmul.bf16.gmra.mxu0 %v1075
    %v1098 = vpop.f32.mrf.mxu0
    %v1099 = vadd.f32 0.0, %v1098
    %v1100 = vpop.f32.mrf.mxu0
    %1101 = vdwg.mxu0
    %1102 = vmatpush.bf16.msra.mxu0 %v578
    %1103 = vmatpush.bf16.msra.mxu0 %v575
    %1104 = vmatpush.bf16.msra.mxu0 %v572
    %1105 = vmatpush.bf16.msra.mxu0 %v569
    %1106 = vmatpush.bf16.msra.mxu0 %v566
    %1107 = vmatpush.bf16.msra.mxu0 %v563
    %1108 = vmatpush.bf16.msra.mxu0 %v560
    %1109 = vmatpush.bf16.msra.mxu0 %v557
    %1110 = vmatmul.bf16.gmra.mxu0 %v1075
    %v1111 = vpop.f32.mrf.mxu0
    %v1112 = vadd.f32 0.0, %v1111
    %v1113 = vpop.f32.mrf.mxu0
    %1114 = vdwg.mxu0
    %v1115 = vadd.f32 %v1072, %v1086
    %v1116 = vxor.u32 %v1115, 2147483648
    %v1117 = vmul.f32 %v1116, 1.442695
    %v1118 = vpow.pop %v1117
    %v1119 = vadd.f32 %v1118, 1.0
    %v1120 = vrcp.pop %v1119
    %v1121 = vmul.f32 %v1119, %v1120
    %v1122 = vsub.f32 1.0, %v1121
    %v1123 = vmul.f32 %v1120, %v1122
    %v1124 = vadd.f32 %v1120, %v1123
    %vm1125 = vweird.f32 %v1119
    %vm1126 = vweird.f32 %v1120
    %vm1127 = vmor %vm1125, %vm1126
    %v1128 = vsel %vm1127, %v1120, %v1124
    %v1129 = vand.u32 2147483647, %v1119
    %vm1130 = vcmp.eq.f32.partialorder %v1129, 8.507059e+37
    %v1131 = vand.u32 %v1119, 2147483648
    %v1132 = vor.u32 1.1754944e-38, %v1131
    %v1133 = vsel %vm1130, %v1132, %v1128
    %v1134 = vmul.f32 1.0, %v1133
    %v1135 = vadd.f32 %v1073, %v1099
    %v1136 = vxor.u32 %v1135, 2147483648
    %v1137 = vmul.f32 %v1136, 1.442695
    %v1138 = vpow.pop %v1137
    %v1139 = vadd.f32 %v1138, 1.0
    %v1140 = vrcp.pop %v1139
    %v1141 = vmul.f32 %v1139, %v1140
    %v1142 = vsub.f32 1.0, %v1141
    %v1143 = vmul.f32 %v1140, %v1142
    %v1144 = vadd.f32 %v1140, %v1143
    %vm1145 = vweird.f32 %v1139
    %vm1146 = vweird.f32 %v1140
    %vm1147 = vmor %vm1145, %vm1146
    %v1148 = vsel %vm1147, %v1140, %v1144
    %v1149 = vand.u32 2147483647, %v1139
    %vm1150 = vcmp.eq.f32.partialorder %v1149, 8.507059e+37
    %v1151 = vand.u32 %v1139, 2147483648
    %v1152 = vor.u32 1.1754944e-38, %v1151
    %v1153 = vsel %vm1150, %v1152, %v1148
    %v1154 = vmul.f32 1.0, %v1153
    %v1155 = vadd.f32 %v1112, %v683
    %v1156 = vmul.f32 %v1134, %v1155
    %v1157 = vadd.f32 %v1074, %v1156
    %v1158 = vtanh.pop %v1157
    %v1159 = vsub.f32 1.0, %v1154
    %v1160 = vmul.f32 %v1159, %v1158
    %v1161 = vmul.f32 %v1154, %v1068
    %v1162 = vadd.f32 %v1160, %v1161
    %s1163 = smul.u32 6, 3
    %s1164 = smul.addr %s1163, 8
    %s1165 = scalar_lea.vmem [#allocation4], %s1164
    %v1166 = vld [vmem:[%s1165] sm:$0xff]
    %v1167 = vld [vmem:[%s1165 + $0x8] sm:$0xff]
    %v1168 = vld [vmem:[%s1165 + $0x10] sm:$0xff]
    %v1169 = vpack.c.bf16 %v1162, %v1162
    %1170 = vmatpush.bf16.msra.mxu0 %v576
    %1171 = vmatpush.bf16.msra.mxu0 %v573
    %1172 = vmatpush.bf16.msra.mxu0 %v570
    %1173 = vmatpush.bf16.msra.mxu0 %v567
    %1174 = vmatpush.bf16.msra.mxu0 %v564
    %1175 = vmatpush.bf16.msra.mxu0 %v561
    %1176 = vmatpush.bf16.msra.mxu0 %v558
    %1177 = vmatpush.bf16.msra.mxu0 %v555
    %1178 = vmatmul.bf16.gmra.mxu0 %v1169
    %v1179 = vpop.f32.mrf.mxu0
    %v1180 = vadd.f32 0.0, %v1179
    %v1181 = vpop.f32.mrf.mxu0
    %1182 = vdwg.mxu0
    %1183 = vmatpush.bf16.msra.mxu0 %v577
    %1184 = vmatpush.bf16.msra.mxu0 %v574
    %1185 = vmatpush.bf16.msra.mxu0 %v571
    %1186 = vmatpush.bf16.msra.mxu0 %v568
    %1187 = vmatpush.bf16.msra.mxu0 %v565
    %1188 = vmatpush.bf16.msra.mxu0 %v562
    %1189 = vmatpush.bf16.msra.mxu0 %v559
    %1190 = vmatpush.bf16.msra.mxu0 %v556
    %1191 = vmatmul.bf16.gmra.mxu0 %v1169
    %v1192 = vpop.f32.mrf.mxu0
    %v1193 = vadd.f32 0.0, %v1192
    %v1194 = vpop.f32.mrf.mxu0
    %1195 = vdwg.mxu0
    %1196 = vmatpush.bf16.msra.mxu0 %v578
    %1197 = vmatpush.bf16.msra.mxu0 %v575
    %1198 = vmatpush.bf16.msra.mxu0 %v572
    %1199 = vmatpush.bf16.msra.mxu0 %v569
    %1200 = vmatpush.bf16.msra.mxu0 %v566
    %1201 = vmatpush.bf16.msra.mxu0 %v563
    %1202 = vmatpush.bf16.msra.mxu0 %v560
    %1203 = vmatpush.bf16.msra.mxu0 %v557
    %1204 = vmatmul.bf16.gmra.mxu0 %v1169
    %v1205 = vpop.f32.mrf.mxu0
    %v1206 = vadd.f32 0.0, %v1205
    %v1207 = vpop.f32.mrf.mxu0
    %1208 = vdwg.mxu0
    %v1209 = vadd.f32 %v1166, %v1180
    %v1210 = vxor.u32 %v1209, 2147483648
    %v1211 = vmul.f32 %v1210, 1.442695
    %v1212 = vpow.pop %v1211
    %v1213 = vadd.f32 %v1212, 1.0
    %v1214 = vrcp.pop %v1213
    %v1215 = vmul.f32 %v1213, %v1214
    %v1216 = vsub.f32 1.0, %v1215
    %v1217 = vmul.f32 %v1214, %v1216
    %v1218 = vadd.f32 %v1214, %v1217
    %vm1219 = vweird.f32 %v1213
    %vm1220 = vweird.f32 %v1214
    %vm1221 = vmor %vm1219, %vm1220
    %v1222 = vsel %vm1221, %v1214, %v1218
    %v1223 = vand.u32 2147483647, %v1213
    %vm1224 = vcmp.eq.f32.partialorder %v1223, 8.507059e+37
    %v1225 = vand.u32 %v1213, 2147483648
    %v1226 = vor.u32 1.1754944e-38, %v1225
    %v1227 = vsel %vm1224, %v1226, %v1222
    %v1228 = vmul.f32 1.0, %v1227
    %v1229 = vadd.f32 %v1167, %v1193
    %v1230 = vxor.u32 %v1229, 2147483648
    %v1231 = vmul.f32 %v1230, 1.442695
    %v1232 = vpow.pop %v1231
    %v1233 = vadd.f32 %v1232, 1.0
    %v1234 = vrcp.pop %v1233
    %v1235 = vmul.f32 %v1233, %v1234
    %v1236 = vsub.f32 1.0, %v1235
    %v1237 = vmul.f32 %v1234, %v1236
    %v1238 = vadd.f32 %v1234, %v1237
    %vm1239 = vweird.f32 %v1233
    %vm1240 = vweird.f32 %v1234
    %vm1241 = vmor %vm1239, %vm1240
    %v1242 = vsel %vm1241, %v1234, %v1238
    %v1243 = vand.u32 2147483647, %v1233
    %vm1244 = vcmp.eq.f32.partialorder %v1243, 8.507059e+37
    %v1245 = vand.u32 %v1233, 2147483648
    %v1246 = vor.u32 1.1754944e-38, %v1245
    %v1247 = vsel %vm1244, %v1246, %v1242
    %v1248 = vmul.f32 1.0, %v1247
    %v1249 = vadd.f32 %v1206, %v683
    %v1250 = vmul.f32 %v1228, %v1249
    %v1251 = vadd.f32 %v1168, %v1250
    %v1252 = vtanh.pop %v1251
    %v1253 = vsub.f32 1.0, %v1248
    %v1254 = vmul.f32 %v1253, %v1252
    %v1255 = vmul.f32 %v1248, %v1162
    %v1256 = vadd.f32 %v1254, %v1255
    %s1257 = smul.u32 7, 3
    %s1258 = smul.addr %s1257, 8
    %s1259 = scalar_lea.vmem [#allocation4], %s1258
    %v1260 = vld [vmem:[%s1259] sm:$0xff]
    %v1261 = vld [vmem:[%s1259 + $0x8] sm:$0xff]
    %v1262 = vld [vmem:[%s1259 + $0x10] sm:$0xff]
    %v1263 = vpack.c.bf16 %v1256, %v1256
    %1264 = vmatpush.bf16.msra.mxu0 %v576
    %1265 = vmatpush.bf16.msra.mxu0 %v573
    %1266 = vmatpush.bf16.msra.mxu0 %v570
    %1267 = vmatpush.bf16.msra.mxu0 %v567
    %1268 = vmatpush.bf16.msra.mxu0 %v564
    %1269 = vmatpush.bf16.msra.mxu0 %v561
    %1270 = vmatpush.bf16.msra.mxu0 %v558
    %1271 = vmatpush.bf16.msra.mxu0 %v555
    %1272 = vmatmul.bf16.gmra.mxu0 %v1263
    %v1273 = vpop.f32.mrf.mxu0
    %v1274 = vadd.f32 0.0, %v1273
    %v1275 = vpop.f32.mrf.mxu0
    %1276 = vdwg.mxu0
    %1277 = vmatpush.bf16.msra.mxu0 %v577
    %1278 = vmatpush.bf16.msra.mxu0 %v574
    %1279 = vmatpush.bf16.msra.mxu0 %v571
    %1280 = vmatpush.bf16.msra.mxu0 %v568
    %1281 = vmatpush.bf16.msra.mxu0 %v565
    %1282 = vmatpush.bf16.msra.mxu0 %v562
    %1283 = vmatpush.bf16.msra.mxu0 %v559
    %1284 = vmatpush.bf16.msra.mxu0 %v556
    %1285 = vmatmul.bf16.gmra.mxu0 %v1263
    %v1286 = vpop.f32.mrf.mxu0
    %v1287 = vadd.f32 0.0, %v1286
    %v1288 = vpop.f32.mrf.mxu0
    %1289 = vdwg.mxu0
    %1290 = vmatpush.bf16.msra.mxu0 %v578
    %1291 = vmatpush.bf16.msra.mxu0 %v575
    %1292 = vmatpush.bf16.msra.mxu0 %v572
    %1293 = vmatpush.bf16.msra.mxu0 %v569
    %1294 = vmatpush.bf16.msra.mxu0 %v566
    %1295 = vmatpush.bf16.msra.mxu0 %v563
    %1296 = vmatpush.bf16.msra.mxu0 %v560
    %1297 = vmatpush.bf16.msra.mxu0 %v557
    %1298 = vmatmul.bf16.gmra.mxu0 %v1263
    %v1299 = vpop.f32.mrf.mxu0
    %v1300 = vadd.f32 0.0, %v1299
    %v1301 = vpop.f32.mrf.mxu0
    %1302 = vdwg.mxu0
    %v1303 = vadd.f32 %v1260, %v1274
    %v1304 = vxor.u32 %v1303, 2147483648
    %v1305 = vmul.f32 %v1304, 1.442695
    %v1306 = vpow.pop %v1305
    %v1307 = vadd.f32 %v1306, 1.0
    %v1308 = vrcp.pop %v1307
    %v1309 = vmul.f32 %v1307, %v1308
    %v1310 = vsub.f32 1.0, %v1309
    %v1311 = vmul.f32 %v1308, %v1310
    %v1312 = vadd.f32 %v1308, %v1311
    %vm1313 = vweird.f32 %v1307
    %vm1314 = vweird.f32 %v1308
    %vm1315 = vmor %vm1313, %vm1314
    %v1316 = vsel %vm1315, %v1308, %v1312
    %v1317 = vand.u32 2147483647, %v1307
    %vm1318 = vcmp.eq.f32.partialorder %v1317, 8.507059e+37
    %v1319 = vand.u32 %v1307, 2147483648
    %v1320 = vor.u32 1.1754944e-38, %v1319
    %v1321 = vsel %vm1318, %v1320, %v1316
    %v1322 = vmul.f32 1.0, %v1321
    %v1323 = vadd.f32 %v1261, %v1287
    %v1324 = vxor.u32 %v1323, 2147483648
    %v1325 = vmul.f32 %v1324, 1.442695
    %v1326 = vpow.pop %v1325
    %v1327 = vadd.f32 %v1326, 1.0
    %v1328 = vrcp.pop %v1327
    %v1329 = vmul.f32 %v1327, %v1328
    %v1330 = vsub.f32 1.0, %v1329
    %v1331 = vmul.f32 %v1328, %v1330
    %v1332 = vadd.f32 %v1328, %v1331
    %vm1333 = vweird.f32 %v1327
    %vm1334 = vweird.f32 %v1328
    %vm1335 = vmor %vm1333, %vm1334
    %v1336 = vsel %vm1335, %v1328, %v1332
    %v1337 = vand.u32 2147483647, %v1327
    %vm1338 = vcmp.eq.f32.partialorder %v1337, 8.507059e+37
    %v1339 = vand.u32 %v1327, 2147483648
    %v1340 = vor.u32 1.1754944e-38, %v1339
    %v1341 = vsel %vm1338, %v1340, %v1336
    %v1342 = vmul.f32 1.0, %v1341
    %v1343 = vadd.f32 %v1300, %v683
    %v1344 = vmul.f32 %v1322, %v1343
    %v1345 = vadd.f32 %v1262, %v1344
    %v1346 = vtanh.pop %v1345
    %v1347 = vsub.f32 1.0, %v1342
    %v1348 = vmul.f32 %v1347, %v1346
    %v1349 = vmul.f32 %v1342, %v1256
    %v1350 = vadd.f32 %v1348, %v1349
    %1351 = vst [vmem:[#allocation15] sm:$0xff] %v1350
    // Predicated region
    $region56: #{tpu_custom_call.1} parent=1 // pred_check
      _
    $region57: #{tpu_custom_call.1} parent=1 // pred_check_branch
      %1353 = sbr.rel (0) target = $region59
    $region58: #{tpu_custom_call.1} parent=1 // pred_region
      %1355 = vsyncadd [#allocation9], 0
      %s1357 = sshll.u32 [#allocation15], 4
      %s1358 = int_to_ptr.vmem [resolvable:$true] %s1357
      %s1359 = sshll.u32 %s7, 4
      %s1360 = int_to_ptr.hbm [resolvable:$true] %s1359
      %1362 = dma.vmem_to_hbm [thread:$0]  %s1358, 128, %s1360, [#allocation9]
    $region59: #{tpu_custom_call.1} parent=1 // pred_fallthru
      _
    // Predicated region
    $region60: #{tpu_custom_call.1} parent=1 // pred_check
      _
    $region61: #{tpu_custom_call.1} parent=1 // pred_check_branch
      %1364 = sbr.rel (0) target = $region63
    $region62: #{tpu_custom_call.1} parent=1 // pred_region
      %1366 = dma.done [#allocation9], 128
    $region63: #{tpu_custom_call.1} parent=1 // pred_fallthru
      _
    %1367 = vsyncpa [#allocation8], 1
    %1368 = vsyncpa [#allocation11], 1
    %1369 = vsyncpa [#allocation14], 1
    %1370 = vsyncpa [#allocation9], 1

</llo_original>
